<compile_context>
chip_gen: v5e
topology: v5e:2x2
jax: 0.10.0
libtpu: 0.0.40
codegen_flags: <defaults>
</compile_context>

<pallas_src>
import jax
import jax.numpy as jnp
from jax.experimental import pallas as pl
from jax.experimental.pallas import tpu as pltpu


def _cdiv(a, b):
    return (a + b - 1) // b


def _round_up(a, b):
    return _cdiv(a, b) * b


# Conservative budget so the tile choice also fits v7x (64 MiB physical VMEM).
_VMEM_BUDGET = 38 * 1024 * 1024


def _pick_tm(M, Dp):
    """Largest row tile from {512,256,128} that fits the VMEM budget."""
    wbytes = 4 * (Dp * 512 + 512 * 256 + 256 * 128 + 128 + 512 + 256 + 128 + 1)
    tm = 128
    for cand in (512, 256, 128):
        need = (2 * cand * Dp * 4                 # double-buffered x tile
                + cand * (512 + 256 + 128) * 4    # fused intermediates / spill
                + wbytes                          # single-buffered weights
                + 4 * cand * 4)                   # tiny output buffers
        if need <= _VMEM_BUDGET:
            tm = cand
            break
    # Keep >=4 grid steps when the row count allows it (megacore on v7x,
    # avoids over-padding small inputs). Halving keeps TM a multiple of 128.
    while tm > 128 and _cdiv(M, tm) < 4:
        tm //= 2
    return tm


def _mlp_kernel(x_ref, w1_ref, b1_ref, w2_ref, b2_ref,
                w3_ref, b3_ref, w4_ref, b4_ref, o_ref):
    # Fused 4-layer MLP on one row tile. Matmuls hit the MXU with f32
    # accumulation; ReLU is a VPU max; final 128->1 projection is a VPU
    # multiply + XLU lane reduction (MXU N=1 matmul avoided).
    x = x_ref[...]

    h = jnp.dot(x, w1_ref[...], preferred_element_type=jnp.float32) + b1_ref[...]
    h = jnp.maximum(h, 0.0)

    h = jnp.dot(h, w2_ref[...], preferred_element_type=jnp.float32) + b2_ref[...]
    h = jnp.maximum(h, 0.0)

    h = jnp.dot(h, w3_ref[...], preferred_element_type=jnp.float32) + b3_ref[...]
    h = jnp.maximum(h, 0.0)

    # h: (TM, 128), w4_ref: (1, 128) row of the final weight, b4_ref: (1,) SMEM.
    out = jnp.sum(h * w4_ref[...], axis=-1) + b4_ref[0]        # (TM,)

    # Lane-dense store: (1, 1, TM) block of the (num_tiles, 1, TM) output.
    o_ref[...] = out.reshape(1, 1, -1).astype(o_ref.dtype)


@jax.jit
def regression_head_forward(x, params):
    """x: [seq_len, batch, d_embedding] -> [seq_len, batch, 1]"""
    w1, b1, w2, b2, w3, b3, w4, b4 = params
    S, B, D = x.shape
    M = S * B

    Dp = _round_up(max(D, 1), 128)          # lane-align K of the first matmul
    TM = _pick_tm(M, Dp)
    Mp = _round_up(M, TM)
    num_tiles = Mp // TM

    xf = x.reshape(M, D)
    if Mp != M or Dp != D:
        xf = jnp.pad(xf, ((0, Mp - M), (0, Dp - D)))
    w1p = jnp.pad(w1, ((0, Dp - D), (0, 0))) if Dp != D else w1
    w4row = w4.reshape(1, 128)               # (128,1) -> (1,128) row
    b4s = b4.reshape(1)                      # scalar bias -> SMEM

    flops = 2 * Mp * (Dp * 512 + 512 * 256 + 256 * 128 + 128)
    wbytes = 4 * (Dp * 512 + 512 * 256 + 256 * 128 + 128 + 512 + 256 + 128 + 1)
    cost = pl.CostEstimate(flops=flops, transcendentals=0,
                           bytes_accessed=Mp * Dp * 4 + Mp * 4 + wbytes)

    # Resident (constant-index) operands: single buffer, no double-buffering.
    def resident(a):
        return pl.BlockSpec(a.shape, lambda i: (0, 0),
                            pipeline_mode=pl.Buffered(1))

    out = pl.pallas_call(
        _mlp_kernel,
        out_shape=jax.ShapeDtypeStruct((num_tiles, 1, TM), jnp.float32),
        grid_spec=pltpu.PrefetchScalarGridSpec(
            num_scalar_prefetch=0,
            grid=(num_tiles,),
            in_specs=[
                pl.BlockSpec((TM, Dp), lambda i: (i, 0)),      # x row tile
                resident(w1p), resident(b1),
                resident(w2), resident(b2),
                resident(w3), resident(b3),
                resident(w4row),
                pl.BlockSpec(memory_space=pltpu.MemorySpace.SMEM),  # b4 scalar
            ],
            out_specs=pl.BlockSpec((1, 1, TM), lambda i: (i, 0, 0)),
        ),
        compiler_params=pltpu.CompilerParams(
            dimension_semantics=("parallel",),
            vmem_limit_bytes=48 * 1024 * 1024),
        cost_estimate=cost,
    )(xf, w1p, b1, w2, b2, w3, b3, w4row, b4s)

    return out.reshape(Mp)[:M].reshape(S, B, 1)


def init_params(key, d_embedding):
    """Deterministic init mimicking nn.Linear (uniform +/- 1/sqrt(fan_in)).

    Weights stored as (in, out) = transpose of PyTorch's (out, in)."""
    dims = [(d_embedding, 512), (512, 256), (256, 128), (128, 1)]
    params = []
    for (fan_in, fan_out) in dims:
        key, kw, kb = jax.random.split(key, 3)
        bound = 1.0 / (fan_in ** 0.5)
        w = jax.random.uniform(kw, (fan_in, fan_out), jnp.float32, -bound, bound)
        b = jax.random.uniform(kb, (1, fan_out), jnp.float32, -bound, bound)
        params += [w, b]
    return tuple(params)


def _reference(x, params):
    w1, b1, w2, b2, w3, b3, w4, b4 = params
    h = jnp.maximum(x @ w1 + b1, 0.0)
    h = jnp.maximum(h @ w2 + b2, 0.0)
    h = jnp.maximum(h @ w3 + b3, 0.0)
    return h @ w4 + b4


if __name__ == "__main__":
    key = jax.random.PRNGKey(0)
    seq_len, batch, d_embedding = 8, 2, 32

    kx, kp = jax.random.split(key)
    x = jax.random.normal(kx, (seq_len, batch, d_embedding), jnp.float32)
    params = init_params(kp, d_embedding)

    out = jax.block_until_ready(regression_head_forward(x, params))
    ref = _reference(x, params)

    assert out.shape == (seq_len, batch, 1), out.shape
    assert jnp.allclose(out, ref, atol=1e-4, rtol=1e-4), "mismatch vs reference"

    print("KERNEL_OK")
</pallas_src>

<mosaic_0001>
module attributes {stable_mosaic.version = 11 : i64} {
  func.func @_mlp_kernel(%arg0: i32, %arg1: memref<128x128xf32, #tpu.memory_space<vmem>>, %arg2: memref<128x512xf32, #tpu.memory_space<vmem>>, %arg3: memref<1x512xf32, #tpu.memory_space<vmem>>, %arg4: memref<512x256xf32, #tpu.memory_space<vmem>>, %arg5: memref<1x256xf32, #tpu.memory_space<vmem>>, %arg6: memref<256x128xf32, #tpu.memory_space<vmem>>, %arg7: memref<1x128xf32, #tpu.memory_space<vmem>>, %arg8: memref<1x128xf32, #tpu.memory_space<vmem>>, %arg9: memref<1xf32, #tpu.memory_space<smem>>, %arg10: memref<1x1x128xf32, #tpu.memory_space<vmem>>) attributes {dimension_semantics = [#tpu.dimension_semantics<parallel>], iteration_bounds = array<i64: 1>, scalar_prefetch = 0 : i64, scratch_operands = 0 : i64, tpu.core_type = #tpu.core_type<tc>, window_params = [{transform_indices = @transform_0, window_bounds = array<i64: 128, 128>}, {pipeline_mode = #tpu.pipeline_mode<synchronous>, transform_indices = @transform_1, window_bounds = array<i64: 128, 512>}, {pipeline_mode = #tpu.pipeline_mode<synchronous>, transform_indices = @transform_2, window_bounds = array<i64: 1, 512>}, {pipeline_mode = #tpu.pipeline_mode<synchronous>, transform_indices = @transform_3, window_bounds = array<i64: 512, 256>}, {pipeline_mode = #tpu.pipeline_mode<synchronous>, transform_indices = @transform_4, window_bounds = array<i64: 1, 256>}, {pipeline_mode = #tpu.pipeline_mode<synchronous>, transform_indices = @transform_5, window_bounds = array<i64: 256, 128>}, {pipeline_mode = #tpu.pipeline_mode<synchronous>, transform_indices = @transform_6, window_bounds = array<i64: 1, 128>}, {pipeline_mode = #tpu.pipeline_mode<synchronous>, transform_indices = @transform_7, window_bounds = array<i64: 1, 128>}, {transform_indices = @transform_8, window_bounds = array<i64: 1>}, {transform_indices = @transform_9, window_bounds = array<i64: 1, 1, 128>}]} {
    %c0 = arith.constant 0 : index
    %c0_0 = arith.constant 0 : index
    %0 = vector.load %arg1[%c0, %c0_0] : memref<128x128xf32, #tpu.memory_space<vmem>>, vector<128x128xf32>
    %c0_1 = arith.constant 0 : index
    %c0_2 = arith.constant 0 : index
    %1 = vector.load %arg2[%c0_1, %c0_2] : memref<128x512xf32, #tpu.memory_space<vmem>>, vector<128x512xf32>
    %cst = arith.constant dense<0.000000e+00> : vector<128x512xf32>
    %2 = tpu.matmul %0, %1, %cst {dimension_numbers = #tpu.dot_dimension_numbers<[1], [0], [0], [1], [0, 0, 1, 1], [], []>} : vector<128x128xf32>, vector<128x512xf32>, vector<128x512xf32> -> vector<128x512xf32>
    %c0_3 = arith.constant 0 : index
    %c0_4 = arith.constant 0 : index
    %3 = vector.load %arg3[%c0_3, %c0_4] : memref<1x512xf32, #tpu.memory_space<vmem>>, vector<1x512xf32>
    %4 = vector.broadcast %3 : vector<1x512xf32> to vector<128x512xf32>
    %5 = arith.addf %2, %4 : vector<128x512xf32>
    %cst_5 = arith.constant 0.000000e+00 : f32
    %6 = vector.broadcast %cst_5 : f32 to vector<128x512xf32>
    %7 = arith.maximumf %5, %6 : vector<128x512xf32>
    %c0_6 = arith.constant 0 : index
    %c0_7 = arith.constant 0 : index
    %8 = vector.load %arg4[%c0_6, %c0_7] : memref<512x256xf32, #tpu.memory_space<vmem>>, vector<512x256xf32>
    %cst_8 = arith.constant dense<0.000000e+00> : vector<128x256xf32>
    %9 = tpu.matmul %7, %8, %cst_8 {dimension_numbers = #tpu.dot_dimension_numbers<[1], [0], [0], [1], [0, 0, 1, 1], [], []>} : vector<128x512xf32>, vector<512x256xf32>, vector<128x256xf32> -> vector<128x256xf32>
    %c0_9 = arith.constant 0 : index
    %c0_10 = arith.constant 0 : index
    %10 = vector.load %arg5[%c0_9, %c0_10] : memref<1x256xf32, #tpu.memory_space<vmem>>, vector<1x256xf32>
    %11 = vector.broadcast %10 : vector<1x256xf32> to vector<128x256xf32>
    %12 = arith.addf %9, %11 : vector<128x256xf32>
    %cst_11 = arith.constant 0.000000e+00 : f32
    %13 = vector.broadcast %cst_11 : f32 to vector<128x256xf32>
    %14 = arith.maximumf %12, %13 : vector<128x256xf32>
    %c0_12 = arith.constant 0 : index
    %c0_13 = arith.constant 0 : index
    %15 = vector.load %arg6[%c0_12, %c0_13] : memref<256x128xf32, #tpu.memory_space<vmem>>, vector<256x128xf32>
    %cst_14 = arith.constant dense<0.000000e+00> : vector<128x128xf32>
    %16 = tpu.matmul %14, %15, %cst_14 {dimension_numbers = #tpu.dot_dimension_numbers<[1], [0], [0], [1], [0, 0, 1, 1], [], []>} : vector<128x256xf32>, vector<256x128xf32>, vector<128x128xf32> -> vector<128x128xf32>
    %c0_15 = arith.constant 0 : index
    %c0_16 = arith.constant 0 : index
    %17 = vector.load %arg7[%c0_15, %c0_16] : memref<1x128xf32, #tpu.memory_space<vmem>>, vector<1x128xf32>
    %18 = vector.broadcast %17 : vector<1x128xf32> to vector<128x128xf32>
    %19 = arith.addf %16, %18 : vector<128x128xf32>
    %cst_17 = arith.constant 0.000000e+00 : f32
    %20 = vector.broadcast %cst_17 : f32 to vector<128x128xf32>
    %21 = arith.maximumf %19, %20 : vector<128x128xf32>
    %c0_18 = arith.constant 0 : index
    %c0_19 = arith.constant 0 : index
    %22 = vector.load %arg8[%c0_18, %c0_19] : memref<1x128xf32, #tpu.memory_space<vmem>>, vector<1x128xf32>
    %23 = vector.broadcast %22 : vector<1x128xf32> to vector<128x128xf32>
    %24 = arith.mulf %21, %23 : vector<128x128xf32>
    %cst_20 = arith.constant dense<0.000000e+00> : vector<128xf32>
    %25 = vector.multi_reduction <add>, %24, %cst_20 [1] : vector<128x128xf32> to vector<128xf32>
    %c0_21 = arith.constant 0 : index
    %26 = memref.load %arg9[%c0_21] : memref<1xf32, #tpu.memory_space<smem>>
    %27 = vector.broadcast %26 : f32 to vector<128xf32>
    %28 = arith.addf %25, %27 : vector<128xf32>
    %29 = vector.shape_cast %28 : vector<128xf32> to vector<1x1x128xf32>
    %c0_22 = arith.constant 0 : index
    %c0_23 = arith.constant 0 : index
    %c0_24 = arith.constant 0 : index
    %30 = vector.load %arg10[%c0_22, %c0_23, %c0_24] : memref<1x1x128xf32, #tpu.memory_space<vmem>>, vector<1x1x128xf32>
    tpu.vector_store %arg10[%c0_22, %c0_23, %c0_24], %29 {strides = array<i32>} : memref<1x1x128xf32, #tpu.memory_space<vmem>>, vector<1x1x128xf32>,
    return
  }
  func.func @transform_0(%arg0: i32) -> (i32, i32) {
    %c0_i32 = arith.constant 0 : i32
    %c0_i32_0 = arith.constant 0 : i32
    return %arg0, %c0_i32 : i32, i32
  }
  func.func @transform_1(%arg0: i32) -> (i32, i32) {
    %c0_i32 = arith.constant 0 : i32
    %c0_i32_0 = arith.constant 0 : i32
    %c0_i32_1 = arith.constant 0 : i32
    return %c0_i32, %c0_i32_0 : i32, i32
  }
  func.func @transform_2(%arg0: i32) -> (i32, i32) {
    %c0_i32 = arith.constant 0 : i32
    %c0_i32_0 = arith.constant 0 : i32
    %c0_i32_1 = arith.constant 0 : i32
    return %c0_i32, %c0_i32_0 : i32, i32
  }
  func.func @transform_3(%arg0: i32) -> (i32, i32) {
    %c0_i32 = arith.constant 0 : i32
    %c0_i32_0 = arith.constant 0 : i32
    %c0_i32_1 = arith.constant 0 : i32
    return %c0_i32, %c0_i32_0 : i32, i32
  }
  func.func @transform_4(%arg0: i32) -> (i32, i32) {
    %c0_i32 = arith.constant 0 : i32
    %c0_i32_0 = arith.constant 0 : i32
    %c0_i32_1 = arith.constant 0 : i32
    return %c0_i32, %c0_i32_0 : i32, i32
  }
  func.func @transform_5(%arg0: i32) -> (i32, i32) {
    %c0_i32 = arith.constant 0 : i32
    %c0_i32_0 = arith.constant 0 : i32
    %c0_i32_1 = arith.constant 0 : i32
    return %c0_i32, %c0_i32_0 : i32, i32
  }
  func.func @transform_6(%arg0: i32) -> (i32, i32) {
    %c0_i32 = arith.constant 0 : i32
    %c0_i32_0 = arith.constant 0 : i32
    %c0_i32_1 = arith.constant 0 : i32
    return %c0_i32, %c0_i32_0 : i32, i32
  }
  func.func @transform_7(%arg0: i32) -> (i32, i32) {
    %c0_i32 = arith.constant 0 : i32
    %c0_i32_0 = arith.constant 0 : i32
    %c0_i32_1 = arith.constant 0 : i32
    return %c0_i32, %c0_i32_0 : i32, i32
  }
  func.func @transform_8(%arg0: i32) -> i32 {
    %c0_i32 = arith.constant 0 : i32
    %c0_i32_0 = arith.constant 0 : i32
    return %c0_i32 : i32
  }
  func.func @transform_9(%arg0: i32) -> (i32, i32, i32) {
    %c0_i32 = arith.constant 0 : i32
    %c0_i32_0 = arith.constant 0 : i32
    %c0_i32_1 = arith.constant 0 : i32
    return %arg0, %c0_i32, %c0_i32_0 : i32, i32, i32
  }
}

</mosaic_0001>

<llo_original>
// kernel: regression_head_forward.1
$region0: #{regression_head_forward.1}
  #allocation0 [shape = 'u32[]', space=smem, size = 0x4, offset = 0x4, fixed_abs, tag = 'smem constant byte address 0x4 - core index']
  #allocation1 [shape = 'u32[72,128]{1,0:T(1,128)}', space=vmem, size = 0x9000, scoped, tag = 'internal scratch']
  #allocation2 [shape = 'f32[1]{0:T(128)S(6)}', space=smem, size = 0x200, scoped, tag = 'scoped memory for regression_head_forward.1']
  %s0 = inlined_call_operand.vmem [shape: f32[128,128], index: 0, kind: input, shape index: {}]
  %s1 = inlined_call_operand.vmem [shape: f32[128,512], index: 1, kind: input, shape index: {}]
  %s2 = inlined_call_operand.vmem [shape: f32[1,512], index: 2, kind: input, shape index: {}]
  %s3 = inlined_call_operand.hbm [shape: f32[512,256], index: 3, kind: input, shape index: {}]
  %s4 = inlined_call_operand.vmem [shape: f32[1,256], index: 4, kind: input, shape index: {}]
  %s5 = inlined_call_operand.vmem [shape: f32[256,128], index: 5, kind: input, shape index: {}]
  %s6 = inlined_call_operand.vmem [shape: f32[1,128], index: 6, kind: input, shape index: {}]
  %s7 = inlined_call_operand.vmem [shape: f32[1,128], index: 7, kind: input, shape index: {}]
  %s8 = inlined_call_operand.<no memory space> [shape: f32[1], index: 8, kind: input, shape index: {}]
  %s9 = inlined_call_operand.vmem [shape: f32[1,1,128], index: 9, kind: output, shape index: {}]
  %s10 = sld [smem:[#allocation0]]
  $region50: #{regression_head_forward.1} parent=0
    _
  %s12 = ssub.s32 1, %s10
  %s13 = scalar_select 0, %s12, %s10
  %14 = sst [smem:[#allocation2]] %s8
  $region1: #{regression_head_forward.1} parent=0
    #allocation3 [shape = 'u8[524288]{0}', space=vmem, size = 0x80000, scoped, tag = 'input window, operand 3, single buffered']
    #allocation4 [shape = 's32[1]{0}', space=sflag, size = 0x4, scoped, tag = 'scoped memory for regression_head_forward.1']
    %15 = vsyncpa [#allocation4], 0
    // Predicated region
    $region2: #{regression_head_forward.1} parent=1 // pred_check
      _
    $region3: #{regression_head_forward.1} parent=1 // pred_check_branch
      %17 = sbr.rel (0) target = $region5
    $region4: #{regression_head_forward.1} parent=1 // pred_region
      _
    $region5: #{regression_head_forward.1} parent=1 // pred_fallthru
      _
    // Predicated region
    $region6: #{regression_head_forward.1} parent=1 // pred_check
      _
    $region7: #{regression_head_forward.1} parent=1 // pred_check_branch
      %19 = sbr.rel (0) target = $region9
    $region8: #{regression_head_forward.1} parent=1 // pred_region
      _
    $region9: #{regression_head_forward.1} parent=1 // pred_fallthru
      _
    // Predicated region
    $region10: #{regression_head_forward.1} parent=1 // pred_check
      _
    $region11: #{regression_head_forward.1} parent=1 // pred_check_branch
      %21 = sbr.rel (0) target = $region13
    $region12: #{regression_head_forward.1} parent=1 // pred_region
      _
    $region13: #{regression_head_forward.1} parent=1 // pred_fallthru
      _
    // Predicated region
    $region14: #{regression_head_forward.1} parent=1 // pred_check
      _
    $region15: #{regression_head_forward.1} parent=1 // pred_check_branch
      %23 = sbr.rel (0) target = $region17
    $region16: #{regression_head_forward.1} parent=1 // pred_region
      %25 = vsyncadd [#allocation4], 0
      %s26 = sshll.u32 %s3, 4
      %s27 = int_to_ptr.hbm [resolvable:$true] %s26
      %s28 = sshll.u32 [#allocation3], 4
      %s29 = int_to_ptr.vmem [resolvable:$true] %s28
      %34 = dma.hbm_to_vmem [thread:$0]  %s27, 16384, %s29, [#allocation4], 256, 256, 16
    $region17: #{regression_head_forward.1} parent=1 // pred_fallthru
      _
    // Predicated region
    $region18: #{regression_head_forward.1} parent=1 // pred_check
      _
    $region19: #{regression_head_forward.1} parent=1 // pred_check_branch
      %36 = sbr.rel (0) target = $region21
    $region20: #{regression_head_forward.1} parent=1 // pred_region
      _
    $region21: #{regression_head_forward.1} parent=1 // pred_fallthru
      _
    // Predicated region
    $region22: #{regression_head_forward.1} parent=1 // pred_check
      _
    $region23: #{regression_head_forward.1} parent=1 // pred_check_branch
      %38 = sbr.rel (0) target = $region25
    $region24: #{regression_head_forward.1} parent=1 // pred_region
      _
    $region25: #{regression_head_forward.1} parent=1 // pred_fallthru
      _
    // Predicated region
    $region26: #{regression_head_forward.1} parent=1 // pred_check
      _
    $region27: #{regression_head_forward.1} parent=1 // pred_check_branch
      %40 = sbr.rel (0) target = $region29
    $region28: #{regression_head_forward.1} parent=1 // pred_region
      _
    $region29: #{regression_head_forward.1} parent=1 // pred_fallthru
      _
    // Predicated region
    $region30: #{regression_head_forward.1} parent=1 // pred_check
      _
    $region31: #{regression_head_forward.1} parent=1 // pred_check_branch
      %42 = sbr.rel (0) target = $region33
    $region32: #{regression_head_forward.1} parent=1 // pred_region
      _
    $region33: #{regression_head_forward.1} parent=1 // pred_fallthru
      _
    // Predicated region
    $region34: #{regression_head_forward.1} parent=1 // pred_check
      _
    $region35: #{regression_head_forward.1} parent=1 // pred_check_branch
      %44 = sbr.rel (0) target = $region37
    $region36: #{regression_head_forward.1} parent=1 // pred_region
      _
    $region37: #{regression_head_forward.1} parent=1 // pred_fallthru
      _
    // Predicated region
    $region38: #{regression_head_forward.1} parent=1 // pred_check
      _
    $region39: #{regression_head_forward.1} parent=1 // pred_check_branch
      %46 = sbr.rel (0) target = $region41
    $region40: #{regression_head_forward.1} parent=1 // pred_region
      %48 = dma.done [#allocation4], 16384
    $region41: #{regression_head_forward.1} parent=1 // pred_fallthru
      _
    %v49 = vld [vmem:[%s0] sm:$0xff]
    %v50 = vld [vmem:[%s0 + $0x8] sm:$0xff]
    %v51 = vld [vmem:[%s0 + $0x10] sm:$0xff]
    %v52 = vld [vmem:[%s0 + $0x18] sm:$0xff]
    %v53 = vld [vmem:[%s0 + $0x20] sm:$0xff]
    %v54 = vld [vmem:[%s0 + $0x28] sm:$0xff]
    %v55 = vld [vmem:[%s0 + $0x30] sm:$0xff]
    %v56 = vld [vmem:[%s0 + $0x38] sm:$0xff]
    %v57 = vld [vmem:[%s0 + $0x40] sm:$0xff]
    %v58 = vld [vmem:[%s0 + $0x48] sm:$0xff]
    %v59 = vld [vmem:[%s0 + $0x50] sm:$0xff]
    %v60 = vld [vmem:[%s0 + $0x58] sm:$0xff]
    %v61 = vld [vmem:[%s0 + $0x60] sm:$0xff]
    %v62 = vld [vmem:[%s0 + $0x68] sm:$0xff]
    %v63 = vld [vmem:[%s0 + $0x70] sm:$0xff]
    %v64 = vld [vmem:[%s0 + $0x78] sm:$0xff]
    %v65 = vld [vmem:[%s1] sm:$0xff]
    %v66 = vld [vmem:[%s1 + $0x8] sm:$0xff]
    %v67 = vld [vmem:[%s1 + $0x10] sm:$0xff]
    %v68 = vld [vmem:[%s1 + $0x18] sm:$0xff]
    %v69 = vld [vmem:[%s1 + $0x20] sm:$0xff]
    %v70 = vld [vmem:[%s1 + $0x28] sm:$0xff]
    %v71 = vld [vmem:[%s1 + $0x30] sm:$0xff]
    %v72 = vld [vmem:[%s1 + $0x38] sm:$0xff]
    %v73 = vld [vmem:[%s1 + $0x40] sm:$0xff]
    %v74 = vld [vmem:[%s1 + $0x48] sm:$0xff]
    %v75 = vld [vmem:[%s1 + $0x50] sm:$0xff]
    %v76 = vld [vmem:[%s1 + $0x58] sm:$0xff]
    %v77 = vld [vmem:[%s1 + $0x60] sm:$0xff]
    %v78 = vld [vmem:[%s1 + $0x68] sm:$0xff]
    %v79 = vld [vmem:[%s1 + $0x70] sm:$0xff]
    %v80 = vld [vmem:[%s1 + $0x78] sm:$0xff]
    %v81 = vld [vmem:[%s1 + $0x80] sm:$0xff]
    %v82 = vld [vmem:[%s1 + $0x88] sm:$0xff]
    %v83 = vld [vmem:[%s1 + $0x90] sm:$0xff]
    %v84 = vld [vmem:[%s1 + $0x98] sm:$0xff]
    %v85 = vld [vmem:[%s1 + $0xa0] sm:$0xff]
    %v86 = vld [vmem:[%s1 + $0xa8] sm:$0xff]
    %v87 = vld [vmem:[%s1 + $0xb0] sm:$0xff]
    %v88 = vld [vmem:[%s1 + $0xb8] sm:$0xff]
    %v89 = vld [vmem:[%s1 + $0xc0] sm:$0xff]
    %v90 = vld [vmem:[%s1 + $0xc8] sm:$0xff]
    %v91 = vld [vmem:[%s1 + $0xd0] sm:$0xff]
    %v92 = vld [vmem:[%s1 + $0xd8] sm:$0xff]
    %v93 = vld [vmem:[%s1 + $0xe0] sm:$0xff]
    %v94 = vld [vmem:[%s1 + $0xe8] sm:$0xff]
    %v95 = vld [vmem:[%s1 + $0xf0] sm:$0xff]
    %v96 = vld [vmem:[%s1 + $0xf8] sm:$0xff]
    %v97 = vld [vmem:[%s1 + $0x100] sm:$0xff]
    %v98 = vld [vmem:[%s1 + $0x108] sm:$0xff]
    %v99 = vld [vmem:[%s1 + $0x110] sm:$0xff]
    %v100 = vld [vmem:[%s1 + $0x118] sm:$0xff]
    %v101 = vld [vmem:[%s1 + $0x120] sm:$0xff]
    %v102 = vld [vmem:[%s1 + $0x128] sm:$0xff]
    %v103 = vld [vmem:[%s1 + $0x130] sm:$0xff]
    %v104 = vld [vmem:[%s1 + $0x138] sm:$0xff]
    %v105 = vld [vmem:[%s1 + $0x140] sm:$0xff]
    %v106 = vld [vmem:[%s1 + $0x148] sm:$0xff]
    %v107 = vld [vmem:[%s1 + $0x150] sm:$0xff]
    %v108 = vld [vmem:[%s1 + $0x158] sm:$0xff]
    %v109 = vld [vmem:[%s1 + $0x160] sm:$0xff]
    %v110 = vld [vmem:[%s1 + $0x168] sm:$0xff]
    %v111 = vld [vmem:[%s1 + $0x170] sm:$0xff]
    %v112 = vld [vmem:[%s1 + $0x178] sm:$0xff]
    %v113 = vld [vmem:[%s1 + $0x180] sm:$0xff]
    %v114 = vld [vmem:[%s1 + $0x188] sm:$0xff]
    %v115 = vld [vmem:[%s1 + $0x190] sm:$0xff]
    %v116 = vld [vmem:[%s1 + $0x198] sm:$0xff]
    %v117 = vld [vmem:[%s1 + $0x1a0] sm:$0xff]
    %v118 = vld [vmem:[%s1 + $0x1a8] sm:$0xff]
    %v119 = vld [vmem:[%s1 + $0x1b0] sm:$0xff]
    %v120 = vld [vmem:[%s1 + $0x1b8] sm:$0xff]
    %v121 = vld [vmem:[%s1 + $0x1c0] sm:$0xff]
    %v122 = vld [vmem:[%s1 + $0x1c8] sm:$0xff]
    %v123 = vld [vmem:[%s1 + $0x1d0] sm:$0xff]
    %v124 = vld [vmem:[%s1 + $0x1d8] sm:$0xff]
    %v125 = vld [vmem:[%s1 + $0x1e0] sm:$0xff]
    %v126 = vld [vmem:[%s1 + $0x1e8] sm:$0xff]
    %v127 = vld [vmem:[%s1 + $0x1f0] sm:$0xff]
    %v128 = vld [vmem:[%s1 + $0x1f8] sm:$0xff]
    %v129 = vld [vmem:[%s2] sm:$0xf]
    %v131 = vperm.slane %v129, 0
    %v132 = vperm.slane %v129, 1
    %v133 = vperm.slane %v129, 2
    %v134 = vperm.slane %v129, 3
    %139 = vmatpush.msra.mxu0 %v125
    %140 = vmatpush.msra.mxu0 %v121
    %141 = vmatpush.msra.mxu0 %v117
    %142 = vmatpush.msra.mxu0 %v113
    %143 = vmatpush.msra.mxu0 %v109
    %144 = vmatpush.msra.mxu0 %v105
    %145 = vmatpush.msra.mxu0 %v101
    %146 = vmatpush.msra.mxu0 %v97
    %147 = vmatpush.msra.mxu0 %v93
    %148 = vmatpush.msra.mxu0 %v89
    %149 = vmatpush.msra.mxu0 %v85
    %150 = vmatpush.msra.mxu0 %v81
    %151 = vmatpush.msra.mxu0 %v77
    %152 = vmatpush.msra.mxu0 %v73
    %153 = vmatpush.msra.mxu0 %v69
    %154 = vmatpush.msra.mxu0 %v65
    %155 = vmatmul.f32.gmra.mxu0 %v49
    %v156 = vpop.f32.mrf.mxu0
    %v157 = vadd.f32 %v131, %v156
    %158 = vmatmul.f32.gmra.mxu0 %v50
    %v159 = vpop.f32.mrf.mxu0
    %v160 = vadd.f32 %v131, %v159
    %161 = vmatmul.f32.gmra.mxu0 %v51
    %v162 = vpop.f32.mrf.mxu0
    %v163 = vadd.f32 %v131, %v162
    %164 = vmatmul.f32.gmra.mxu0 %v52
    %v165 = vpop.f32.mrf.mxu0
    %v166 = vadd.f32 %v131, %v165
    %167 = vmatmul.f32.gmra.mxu0 %v53
    %v168 = vpop.f32.mrf.mxu0
    %v169 = vadd.f32 %v131, %v168
    %170 = vmatmul.f32.gmra.mxu0 %v54
    %v171 = vpop.f32.mrf.mxu0
    %v172 = vadd.f32 %v131, %v171
    %173 = vmatmul.f32.gmra.mxu0 %v55
    %v174 = vpop.f32.mrf.mxu0
    %v175 = vadd.f32 %v131, %v174
    %176 = vmatmul.f32.gmra.mxu0 %v56
    %v177 = vpop.f32.mrf.mxu0
    %v178 = vadd.f32 %v131, %v177
    %179 = vmatmul.f32.gmra.mxu0 %v57
    %v180 = vpop.f32.mrf.mxu0
    %v181 = vadd.f32 %v131, %v180
    %182 = vmatmul.f32.gmra.mxu0 %v58
    %v183 = vpop.f32.mrf.mxu0
    %v184 = vadd.f32 %v131, %v183
    %185 = vmatmul.f32.gmra.mxu0 %v59
    %v186 = vpop.f32.mrf.mxu0
    %v187 = vadd.f32 %v131, %v186
    %188 = vmatmul.f32.gmra.mxu0 %v60
    %v189 = vpop.f32.mrf.mxu0
    %v190 = vadd.f32 %v131, %v189
    %191 = vmatmul.f32.gmra.mxu0 %v61
    %v192 = vpop.f32.mrf.mxu0
    %v193 = vadd.f32 %v131, %v192
    %194 = vmatmul.f32.gmra.mxu0 %v62
    %v195 = vpop.f32.mrf.mxu0
    %v196 = vadd.f32 %v131, %v195
    %197 = vmatmul.f32.gmra.mxu0 %v63
    %v198 = vpop.f32.mrf.mxu0
    %v199 = vadd.f32 %v131, %v198
    %200 = vmatmul.f32.gmra.mxu0 %v64
    %v201 = vpop.f32.mrf.mxu0
    %v202 = vadd.f32 %v131, %v201
    %203 = vdwg.mxu0
    %204 = vmatpush.msra.mxu0 %v126
    %205 = vmatpush.msra.mxu0 %v122
    %206 = vmatpush.msra.mxu0 %v118
    %207 = vmatpush.msra.mxu0 %v114
    %208 = vmatpush.msra.mxu0 %v110
    %209 = vmatpush.msra.mxu0 %v106
    %210 = vmatpush.msra.mxu0 %v102
    %211 = vmatpush.msra.mxu0 %v98
    %212 = vmatpush.msra.mxu0 %v94
    %213 = vmatpush.msra.mxu0 %v90
    %214 = vmatpush.msra.mxu0 %v86
    %215 = vmatpush.msra.mxu0 %v82
    %216 = vmatpush.msra.mxu0 %v78
    %217 = vmatpush.msra.mxu0 %v74
    %218 = vmatpush.msra.mxu0 %v70
    %219 = vmatpush.msra.mxu0 %v66
    %220 = vmatmul.f32.gmra.mxu0 %v49
    %v221 = vpop.f32.mrf.mxu0
    %v222 = vadd.f32 %v132, %v221
    %223 = vmatmul.f32.gmra.mxu0 %v50
    %v224 = vpop.f32.mrf.mxu0
    %v225 = vadd.f32 %v132, %v224
    %226 = vmatmul.f32.gmra.mxu0 %v51
    %v227 = vpop.f32.mrf.mxu0
    %v228 = vadd.f32 %v132, %v227
    %229 = vmatmul.f32.gmra.mxu0 %v52
    %v230 = vpop.f32.mrf.mxu0
    %v231 = vadd.f32 %v132, %v230
    %232 = vmatmul.f32.gmra.mxu0 %v53
    %v233 = vpop.f32.mrf.mxu0
    %v234 = vadd.f32 %v132, %v233
    %235 = vmatmul.f32.gmra.mxu0 %v54
    %v236 = vpop.f32.mrf.mxu0
    %v237 = vadd.f32 %v132, %v236
    %238 = vmatmul.f32.gmra.mxu0 %v55
    %v239 = vpop.f32.mrf.mxu0
    %v240 = vadd.f32 %v132, %v239
    %241 = vmatmul.f32.gmra.mxu0 %v56
    %v242 = vpop.f32.mrf.mxu0
    %v243 = vadd.f32 %v132, %v242
    %244 = vmatmul.f32.gmra.mxu0 %v57
    %v245 = vpop.f32.mrf.mxu0
    %v246 = vadd.f32 %v132, %v245
    %247 = vmatmul.f32.gmra.mxu0 %v58
    %v248 = vpop.f32.mrf.mxu0
    %v249 = vadd.f32 %v132, %v248
    %250 = vmatmul.f32.gmra.mxu0 %v59
    %v251 = vpop.f32.mrf.mxu0
    %v252 = vadd.f32 %v132, %v251
    %253 = vmatmul.f32.gmra.mxu0 %v60
    %v254 = vpop.f32.mrf.mxu0
    %v255 = vadd.f32 %v132, %v254
    %256 = vmatmul.f32.gmra.mxu0 %v61
    %v257 = vpop.f32.mrf.mxu0
    %v258 = vadd.f32 %v132, %v257
    %259 = vmatmul.f32.gmra.mxu0 %v62
    %v260 = vpop.f32.mrf.mxu0
    %v261 = vadd.f32 %v132, %v260
    %262 = vmatmul.f32.gmra.mxu0 %v63
    %v263 = vpop.f32.mrf.mxu0
    %v264 = vadd.f32 %v132, %v263
    %265 = vmatmul.f32.gmra.mxu0 %v64
    %v266 = vpop.f32.mrf.mxu0
    %v267 = vadd.f32 %v132, %v266
    %268 = vdwg.mxu0
    %269 = vmatpush.msra.mxu0 %v127
    %270 = vmatpush.msra.mxu0 %v123
    %271 = vmatpush.msra.mxu0 %v119
    %272 = vmatpush.msra.mxu0 %v115
    %273 = vmatpush.msra.mxu0 %v111
    %274 = vmatpush.msra.mxu0 %v107
    %275 = vmatpush.msra.mxu0 %v103
    %276 = vmatpush.msra.mxu0 %v99
    %277 = vmatpush.msra.mxu0 %v95
    %278 = vmatpush.msra.mxu0 %v91
    %279 = vmatpush.msra.mxu0 %v87
    %280 = vmatpush.msra.mxu0 %v83
    %281 = vmatpush.msra.mxu0 %v79
    %282 = vmatpush.msra.mxu0 %v75
    %283 = vmatpush.msra.mxu0 %v71
    %284 = vmatpush.msra.mxu0 %v67
    %285 = vmatmul.f32.gmra.mxu0 %v49
    %v286 = vpop.f32.mrf.mxu0
    %v287 = vadd.f32 %v133, %v286
    %288 = vmatmul.f32.gmra.mxu0 %v50
    %v289 = vpop.f32.mrf.mxu0
    %v290 = vadd.f32 %v133, %v289
    %291 = vmatmul.f32.gmra.mxu0 %v51
    %v292 = vpop.f32.mrf.mxu0
    %v293 = vadd.f32 %v133, %v292
    %294 = vmatmul.f32.gmra.mxu0 %v52
    %v295 = vpop.f32.mrf.mxu0
    %v296 = vadd.f32 %v133, %v295
    %297 = vmatmul.f32.gmra.mxu0 %v53
    %v298 = vpop.f32.mrf.mxu0
    %v299 = vadd.f32 %v133, %v298
    %300 = vmatmul.f32.gmra.mxu0 %v54
    %v301 = vpop.f32.mrf.mxu0
    %v302 = vadd.f32 %v133, %v301
    %303 = vmatmul.f32.gmra.mxu0 %v55
    %v304 = vpop.f32.mrf.mxu0
    %v305 = vadd.f32 %v133, %v304
    %306 = vmatmul.f32.gmra.mxu0 %v56
    %v307 = vpop.f32.mrf.mxu0
    %v308 = vadd.f32 %v133, %v307
    %309 = vmatmul.f32.gmra.mxu0 %v57
    %v310 = vpop.f32.mrf.mxu0
    %v311 = vadd.f32 %v133, %v310
    %312 = vmatmul.f32.gmra.mxu0 %v58
    %v313 = vpop.f32.mrf.mxu0
    %v314 = vadd.f32 %v133, %v313
    %315 = vmatmul.f32.gmra.mxu0 %v59
    %v316 = vpop.f32.mrf.mxu0
    %v317 = vadd.f32 %v133, %v316
    %318 = vmatmul.f32.gmra.mxu0 %v60
    %v319 = vpop.f32.mrf.mxu0
    %v320 = vadd.f32 %v133, %v319
    %321 = vmatmul.f32.gmra.mxu0 %v61
    %v322 = vpop.f32.mrf.mxu0
    %v323 = vadd.f32 %v133, %v322
    %324 = vmatmul.f32.gmra.mxu0 %v62
    %v325 = vpop.f32.mrf.mxu0
    %v326 = vadd.f32 %v133, %v325
    %327 = vmatmul.f32.gmra.mxu0 %v63
    %v328 = vpop.f32.mrf.mxu0
    %v329 = vadd.f32 %v133, %v328
    %330 = vmatmul.f32.gmra.mxu0 %v64
    %v331 = vpop.f32.mrf.mxu0
    %v332 = vadd.f32 %v133, %v331
    %333 = vdwg.mxu0
    %334 = vmatpush.msra.mxu0 %v128
    %335 = vmatpush.msra.mxu0 %v124
    %336 = vmatpush.msra.mxu0 %v120
    %337 = vmatpush.msra.mxu0 %v116
    %338 = vmatpush.msra.mxu0 %v112
    %339 = vmatpush.msra.mxu0 %v108
    %340 = vmatpush.msra.mxu0 %v104
    %341 = vmatpush.msra.mxu0 %v100
    %342 = vmatpush.msra.mxu0 %v96
    %343 = vmatpush.msra.mxu0 %v92
    %344 = vmatpush.msra.mxu0 %v88
    %345 = vmatpush.msra.mxu0 %v84
    %346 = vmatpush.msra.mxu0 %v80
    %347 = vmatpush.msra.mxu0 %v76
    %348 = vmatpush.msra.mxu0 %v72
    %349 = vmatpush.msra.mxu0 %v68
    %350 = vmatmul.f32.gmra.mxu0 %v49
    %v351 = vpop.f32.mrf.mxu0
    %v352 = vadd.f32 %v134, %v351
    %353 = vmatmul.f32.gmra.mxu0 %v50
    %v354 = vpop.f32.mrf.mxu0
    %v355 = vadd.f32 %v134, %v354
    %356 = vmatmul.f32.gmra.mxu0 %v51
    %v357 = vpop.f32.mrf.mxu0
    %v358 = vadd.f32 %v134, %v357
    %359 = vmatmul.f32.gmra.mxu0 %v52
    %v360 = vpop.f32.mrf.mxu0
    %v361 = vadd.f32 %v134, %v360
    %362 = vmatmul.f32.gmra.mxu0 %v53
    %v363 = vpop.f32.mrf.mxu0
    %v364 = vadd.f32 %v134, %v363
    %365 = vmatmul.f32.gmra.mxu0 %v54
    %v366 = vpop.f32.mrf.mxu0
    %v367 = vadd.f32 %v134, %v366
    %368 = vmatmul.f32.gmra.mxu0 %v55
    %v369 = vpop.f32.mrf.mxu0
    %v370 = vadd.f32 %v134, %v369
    %371 = vmatmul.f32.gmra.mxu0 %v56
    %v372 = vpop.f32.mrf.mxu0
    %v373 = vadd.f32 %v134, %v372
    %374 = vmatmul.f32.gmra.mxu0 %v57
    %v375 = vpop.f32.mrf.mxu0
    %v376 = vadd.f32 %v134, %v375
    %377 = vmatmul.f32.gmra.mxu0 %v58
    %v378 = vpop.f32.mrf.mxu0
    %v379 = vadd.f32 %v134, %v378
    %380 = vmatmul.f32.gmra.mxu0 %v59
    %v381 = vpop.f32.mrf.mxu0
    %v382 = vadd.f32 %v134, %v381
    %383 = vmatmul.f32.gmra.mxu0 %v60
    %v384 = vpop.f32.mrf.mxu0
    %v385 = vadd.f32 %v134, %v384
    %386 = vmatmul.f32.gmra.mxu0 %v61
    %v387 = vpop.f32.mrf.mxu0
    %v388 = vadd.f32 %v134, %v387
    %389 = vmatmul.f32.gmra.mxu0 %v62
    %v390 = vpop.f32.mrf.mxu0
    %v391 = vadd.f32 %v134, %v390
    %392 = vmatmul.f32.gmra.mxu0 %v63
    %v393 = vpop.f32.mrf.mxu0
    %v394 = vadd.f32 %v134, %v393
    %395 = vmatmul.f32.gmra.mxu0 %v64
    %v396 = vpop.f32.mrf.mxu0
    %v397 = vadd.f32 %v134, %v396
    %398 = vdwg.mxu0
    %v399 = vmax.f32 %v157, 0.0
    %v400 = vmax.f32 %v222, 0.0
    %v401 = vmax.f32 %v287, 0.0
    %v402 = vmax.f32 %v352, 0.0
    %v403 = vmax.f32 %v160, 0.0
    %v404 = vmax.f32 %v225, 0.0
    %v405 = vmax.f32 %v290, 0.0
    %v406 = vmax.f32 %v355, 0.0
    %v407 = vmax.f32 %v163, 0.0
    %v408 = vmax.f32 %v228, 0.0
    %v409 = vmax.f32 %v293, 0.0
    %v410 = vmax.f32 %v358, 0.0
    %v411 = vmax.f32 %v166, 0.0
    %v412 = vmax.f32 %v231, 0.0
    %v413 = vmax.f32 %v296, 0.0
    %v414 = vmax.f32 %v361, 0.0
    %v415 = vmax.f32 %v169, 0.0
    %v416 = vmax.f32 %v234, 0.0
    %v417 = vmax.f32 %v299, 0.0
    %v418 = vmax.f32 %v364, 0.0
    %v419 = vmax.f32 %v172, 0.0
    %v420 = vmax.f32 %v237, 0.0
    %v421 = vmax.f32 %v302, 0.0
    %v422 = vmax.f32 %v367, 0.0
    %v423 = vmax.f32 %v175, 0.0
    %v424 = vmax.f32 %v240, 0.0
    %v425 = vmax.f32 %v305, 0.0
    %v426 = vmax.f32 %v370, 0.0
    %v427 = vmax.f32 %v178, 0.0
    %v428 = vmax.f32 %v243, 0.0
    %v429 = vmax.f32 %v308, 0.0
    %v430 = vmax.f32 %v373, 0.0
    %v431 = vmax.f32 %v181, 0.0
    %v432 = vmax.f32 %v246, 0.0
    %v433 = vmax.f32 %v311, 0.0
    %v434 = vmax.f32 %v376, 0.0
    %v435 = vmax.f32 %v184, 0.0
    %v436 = vmax.f32 %v249, 0.0
    %v437 = vmax.f32 %v314, 0.0
    %v438 = vmax.f32 %v379, 0.0
    %v439 = vmax.f32 %v187, 0.0
    %v440 = vmax.f32 %v252, 0.0
    %v441 = vmax.f32 %v317, 0.0
    %v442 = vmax.f32 %v382, 0.0
    %v443 = vmax.f32 %v190, 0.0
    %v444 = vmax.f32 %v255, 0.0
    %v445 = vmax.f32 %v320, 0.0
    %v446 = vmax.f32 %v385, 0.0
    %v447 = vmax.f32 %v193, 0.0
    %v448 = vmax.f32 %v258, 0.0
    %v449 = vmax.f32 %v323, 0.0
    %v450 = vmax.f32 %v388, 0.0
    %v451 = vmax.f32 %v196, 0.0
    %v452 = vmax.f32 %v261, 0.0
    %v453 = vmax.f32 %v326, 0.0
    %v454 = vmax.f32 %v391, 0.0
    %v455 = vmax.f32 %v199, 0.0
    %v456 = vmax.f32 %v264, 0.0
    %v457 = vmax.f32 %v329, 0.0
    %v458 = vmax.f32 %v394, 0.0
    %v459 = vmax.f32 %v202, 0.0
    %v460 = vmax.f32 %v267, 0.0
    %v461 = vmax.f32 %v332, 0.0
    %v462 = vmax.f32 %v397, 0.0
    %v463 = vld [vmem:[#allocation3] sm:$0xff]
    %v464 = vld [vmem:[#allocation3 + $0x8] sm:$0xff]
    %v465 = vld [vmem:[#allocation3 + $0x10] sm:$0xff]
    %v466 = vld [vmem:[#allocation3 + $0x18] sm:$0xff]
    %v467 = vld [vmem:[#allocation3 + $0x20] sm:$0xff]
    %v468 = vld [vmem:[#allocation3 + $0x28] sm:$0xff]
    %v469 = vld [vmem:[#allocation3 + $0x30] sm:$0xff]
    %v470 = vld [vmem:[#allocation3 + $0x38] sm:$0xff]
    %v471 = vld [vmem:[#allocation3 + $0x40] sm:$0xff]
    %v472 = vld [vmem:[#allocation3 + $0x48] sm:$0xff]
    %v473 = vld [vmem:[#allocation3 + $0x50] sm:$0xff]
    %v474 = vld [vmem:[#allocation3 + $0x58] sm:$0xff]
    %v475 = vld [vmem:[#allocation3 + $0x60] sm:$0xff]
    %v476 = vld [vmem:[#allocation3 + $0x68] sm:$0xff]
    %v477 = vld [vmem:[#allocation3 + $0x70] sm:$0xff]
    %v478 = vld [vmem:[#allocation3 + $0x78] sm:$0xff]
    %v479 = vld [vmem:[#allocation3 + $0x80] sm:$0xff]
    %v480 = vld [vmem:[#allocation3 + $0x88] sm:$0xff]
    %v481 = vld [vmem:[#allocation3 + $0x90] sm:$0xff]
    %v482 = vld [vmem:[#allocation3 + $0x98] sm:$0xff]
    %v483 = vld [vmem:[#allocation3 + $0xa0] sm:$0xff]
    %v484 = vld [vmem:[#allocation3 + $0xa8] sm:$0xff]
    %v485 = vld [vmem:[#allocation3 + $0xb0] sm:$0xff]
    %v486 = vld [vmem:[#allocation3 + $0xb8] sm:$0xff]
    %v487 = vld [vmem:[#allocation3 + $0xc0] sm:$0xff]
    %v488 = vld [vmem:[#allocation3 + $0xc8] sm:$0xff]
    %v489 = vld [vmem:[#allocation3 + $0xd0] sm:$0xff]
    %v490 = vld [vmem:[#allocation3 + $0xd8] sm:$0xff]
    %v491 = vld [vmem:[#allocation3 + $0xe0] sm:$0xff]
    %v492 = vld [vmem:[#allocation3 + $0xe8] sm:$0xff]
    %v493 = vld [vmem:[#allocation3 + $0xf0] sm:$0xff]
    %v494 = vld [vmem:[#allocation3 + $0xf8] sm:$0xff]
    %v495 = vld [vmem:[#allocation3 + $0x100] sm:$0xff]
    %v496 = vld [vmem:[#allocation3 + $0x108] sm:$0xff]
    %v497 = vld [vmem:[#allocation3 + $0x110] sm:$0xff]
    %v498 = vld [vmem:[#allocation3 + $0x118] sm:$0xff]
    %v499 = vld [vmem:[#allocation3 + $0x120] sm:$0xff]
    %v500 = vld [vmem:[#allocation3 + $0x128] sm:$0xff]
    %v501 = vld [vmem:[#allocation3 + $0x130] sm:$0xff]
    %v502 = vld [vmem:[#allocation3 + $0x138] sm:$0xff]
    %v503 = vld [vmem:[#allocation3 + $0x140] sm:$0xff]
    %v504 = vld [vmem:[#allocation3 + $0x148] sm:$0xff]
    %v505 = vld [vmem:[#allocation3 + $0x150] sm:$0xff]
    %v506 = vld [vmem:[#allocation3 + $0x158] sm:$0xff]
    %v507 = vld [vmem:[#allocation3 + $0x160] sm:$0xff]
    %v508 = vld [vmem:[#allocation3 + $0x168] sm:$0xff]
    %v509 = vld [vmem:[#allocation3 + $0x170] sm:$0xff]
    %v510 = vld [vmem:[#allocation3 + $0x178] sm:$0xff]
    %v511 = vld [vmem:[#allocation3 + $0x180] sm:$0xff]
    %v512 = vld [vmem:[#allocation3 + $0x188] sm:$0xff]
    %v513 = vld [vmem:[#allocation3 + $0x190] sm:$0xff]
    %v514 = vld [vmem:[#allocation3 + $0x198] sm:$0xff]
    %v515 = vld [vmem:[#allocation3 + $0x1a0] sm:$0xff]
    %v516 = vld [vmem:[#allocation3 + $0x1a8] sm:$0xff]
    %v517 = vld [vmem:[#allocation3 + $0x1b0] sm:$0xff]
    %v518 = vld [vmem:[#allocation3 + $0x1b8] sm:$0xff]
    %v519 = vld [vmem:[#allocation3 + $0x1c0] sm:$0xff]
    %v520 = vld [vmem:[#allocation3 + $0x1c8] sm:$0xff]
    %v521 = vld [vmem:[#allocation3 + $0x1d0] sm:$0xff]
    %v522 = vld [vmem:[#allocation3 + $0x1d8] sm:$0xff]
    %v523 = vld [vmem:[#allocation3 + $0x1e0] sm:$0xff]
    %v524 = vld [vmem:[#allocation3 + $0x1e8] sm:$0xff]
    %v525 = vld [vmem:[#allocation3 + $0x1f0] sm:$0xff]
    %v526 = vld [vmem:[#allocation3 + $0x1f8] sm:$0xff]
    %v527 = vld [vmem:[#allocation3 + $0x200] sm:$0xff]
    %v528 = vld [vmem:[#allocation3 + $0x208] sm:$0xff]
    %v529 = vld [vmem:[#allocation3 + $0x210] sm:$0xff]
    %v530 = vld [vmem:[#allocation3 + $0x218] sm:$0xff]
    %v531 = vld [vmem:[#allocation3 + $0x220] sm:$0xff]
    %v532 = vld [vmem:[#allocation3 + $0x228] sm:$0xff]
    %v533 = vld [vmem:[#allocation3 + $0x230] sm:$0xff]
    %v534 = vld [vmem:[#allocation3 + $0x238] sm:$0xff]
    %v535 = vld [vmem:[#allocation3 + $0x240] sm:$0xff]
    %v536 = vld [vmem:[#allocation3 + $0x248] sm:$0xff]
    %v537 = vld [vmem:[#allocation3 + $0x250] sm:$0xff]
    %v538 = vld [vmem:[#allocation3 + $0x258] sm:$0xff]
    %v539 = vld [vmem:[#allocation3 + $0x260] sm:$0xff]
    %v540 = vld [vmem:[#allocation3 + $0x268] sm:$0xff]
    %v541 = vld [vmem:[#allocation3 + $0x270] sm:$0xff]
    %v542 = vld [vmem:[#allocation3 + $0x278] sm:$0xff]
    %v543 = vld [vmem:[#allocation3 + $0x280] sm:$0xff]
    %v544 = vld [vmem:[#allocation3 + $0x288] sm:$0xff]
    %v545 = vld [vmem:[#allocation3 + $0x290] sm:$0xff]
    %v546 = vld [vmem:[#allocation3 + $0x298] sm:$0xff]
    %v547 = vld [vmem:[#allocation3 + $0x2a0] sm:$0xff]
    %v548 = vld [vmem:[#allocation3 + $0x2a8] sm:$0xff]
    %v549 = vld [vmem:[#allocation3 + $0x2b0] sm:$0xff]
    %v550 = vld [vmem:[#allocation3 + $0x2b8] sm:$0xff]
    %v551 = vld [vmem:[#allocation3 + $0x2c0] sm:$0xff]
    %v552 = vld [vmem:[#allocation3 + $0x2c8] sm:$0xff]
    %v553 = vld [vmem:[#allocation3 + $0x2d0] sm:$0xff]
    %v554 = vld [vmem:[#allocation3 + $0x2d8] sm:$0xff]
    %v555 = vld [vmem:[#allocation3 + $0x2e0] sm:$0xff]
    %v556 = vld [vmem:[#allocation3 + $0x2e8] sm:$0xff]
    %v557 = vld [vmem:[#allocation3 + $0x2f0] sm:$0xff]
    %v558 = vld [vmem:[#allocation3 + $0x2f8] sm:$0xff]
    %v559 = vld [vmem:[#allocation3 + $0x300] sm:$0xff]
    %v560 = vld [vmem:[#allocation3 + $0x308] sm:$0xff]
    %v561 = vld [vmem:[#allocation3 + $0x310] sm:$0xff]
    %v562 = vld [vmem:[#allocation3 + $0x318] sm:$0xff]
    %v563 = vld [vmem:[#allocation3 + $0x320] sm:$0xff]
    %v564 = vld [vmem:[#allocation3 + $0x328] sm:$0xff]
    %v565 = vld [vmem:[#allocation3 + $0x330] sm:$0xff]
    %v566 = vld [vmem:[#allocation3 + $0x338] sm:$0xff]
    %v567 = vld [vmem:[#allocation3 + $0x340] sm:$0xff]
    %v568 = vld [vmem:[#allocation3 + $0x348] sm:$0xff]
    %v569 = vld [vmem:[#allocation3 + $0x350] sm:$0xff]
    %v570 = vld [vmem:[#allocation3 + $0x358] sm:$0xff]
    %v571 = vld [vmem:[#allocation3 + $0x360] sm:$0xff]
    %v572 = vld [vmem:[#allocation3 + $0x368] sm:$0xff]
    %v573 = vld [vmem:[#allocation3 + $0x370] sm:$0xff]
    %v574 = vld [vmem:[#allocation3 + $0x378] sm:$0xff]
    %v575 = vld [vmem:[#allocation3 + $0x380] sm:$0xff]
    %v576 = vld [vmem:[#allocation3 + $0x388] sm:$0xff]
    %v577 = vld [vmem:[#allocation3 + $0x390] sm:$0xff]
    %v578 = vld [vmem:[#allocation3 + $0x398] sm:$0xff]
    %v579 = vld [vmem:[#allocation3 + $0x3a0] sm:$0xff]
    %v580 = vld [vmem:[#allocation3 + $0x3a8] sm:$0xff]
    %v581 = vld [vmem:[#allocation3 + $0x3b0] sm:$0xff]
    %v582 = vld [vmem:[#allocation3 + $0x3b8] sm:$0xff]
    %v583 = vld [vmem:[#allocation3 + $0x3c0] sm:$0xff]
    %v584 = vld [vmem:[#allocation3 + $0x3c8] sm:$0xff]
    %v585 = vld [vmem:[#allocation3 + $0x3d0] sm:$0xff]
    %v586 = vld [vmem:[#allocation3 + $0x3d8] sm:$0xff]
    %v587 = vld [vmem:[#allocation3 + $0x3e0] sm:$0xff]
    %v588 = vld [vmem:[#allocation3 + $0x3e8] sm:$0xff]
    %v589 = vld [vmem:[#allocation3 + $0x3f0] sm:$0xff]
    %v590 = vld [vmem:[#allocation3 + $0x3f8] sm:$0xff]
    %v591 = vld [vmem:[%s4] sm:$0x3]
    %v593 = vperm.slane %v591, 0
    %v594 = vperm.slane %v591, 1
    %597 = vmatpush.msra.mxu0 %v493
    %598 = vmatpush.msra.mxu0 %v491
    %599 = vmatpush.msra.mxu0 %v489
    %600 = vmatpush.msra.mxu0 %v487
    %601 = vmatpush.msra.mxu0 %v485
    %602 = vmatpush.msra.mxu0 %v483
    %603 = vmatpush.msra.mxu0 %v481
    %604 = vmatpush.msra.mxu0 %v479
    %605 = vmatpush.msra.mxu0 %v477
    %606 = vmatpush.msra.mxu0 %v475
    %607 = vmatpush.msra.mxu0 %v473
    %608 = vmatpush.msra.mxu0 %v471
    %609 = vmatpush.msra.mxu0 %v469
    %610 = vmatpush.msra.mxu0 %v467
    %611 = vmatpush.msra.mxu0 %v465
    %612 = vmatpush.msra.mxu0 %v463
    %613 = vmatmul.f32.gmra.mxu0 %v399
    %v614 = vpop.f32.mrf.mxu0
    %v615 = vadd.f32 %v593, %v614
    %616 = vmatmul.f32.gmra.mxu0 %v403
    %v617 = vpop.f32.mrf.mxu0
    %v618 = vadd.f32 %v593, %v617
    %619 = vmatmul.f32.gmra.mxu0 %v407
    %v620 = vpop.f32.mrf.mxu0
    %v621 = vadd.f32 %v593, %v620
    %622 = vmatmul.f32.gmra.mxu0 %v411
    %v623 = vpop.f32.mrf.mxu0
    %v624 = vadd.f32 %v593, %v623
    %625 = vmatmul.f32.gmra.mxu0 %v415
    %v626 = vpop.f32.mrf.mxu0
    %v627 = vadd.f32 %v593, %v626
    %628 = vmatmul.f32.gmra.mxu0 %v419
    %v629 = vpop.f32.mrf.mxu0
    %v630 = vadd.f32 %v593, %v629
    %631 = vmatmul.f32.gmra.mxu0 %v423
    %v632 = vpop.f32.mrf.mxu0
    %v633 = vadd.f32 %v593, %v632
    %634 = vmatmul.f32.gmra.mxu0 %v427
    %v635 = vpop.f32.mrf.mxu0
    %v636 = vadd.f32 %v593, %v635
    %637 = vmatmul.f32.gmra.mxu0 %v431
    %v638 = vpop.f32.mrf.mxu0
    %v639 = vadd.f32 %v593, %v638
    %640 = vmatmul.f32.gmra.mxu0 %v435
    %v641 = vpop.f32.mrf.mxu0
    %v642 = vadd.f32 %v593, %v641
    %643 = vmatmul.f32.gmra.mxu0 %v439
    %v644 = vpop.f32.mrf.mxu0
    %v645 = vadd.f32 %v593, %v644
    %646 = vmatmul.f32.gmra.mxu0 %v443
    %v647 = vpop.f32.mrf.mxu0
    %v648 = vadd.f32 %v593, %v647
    %649 = vmatmul.f32.gmra.mxu0 %v447
    %v650 = vpop.f32.mrf.mxu0
    %v651 = vadd.f32 %v593, %v650
    %652 = vmatmul.f32.gmra.mxu0 %v451
    %v653 = vpop.f32.mrf.mxu0
    %v654 = vadd.f32 %v593, %v653
    %655 = vmatmul.f32.gmra.mxu0 %v455
    %v656 = vpop.f32.mrf.mxu0
    %v657 = vadd.f32 %v593, %v656
    %658 = vmatmul.f32.gmra.mxu0 %v459
    %v659 = vpop.f32.mrf.mxu0
    %v660 = vadd.f32 %v593, %v659
    %661 = vdwg.mxu0
    %662 = vmatpush.msra.mxu0 %v525
    %663 = vmatpush.msra.mxu0 %v523
    %664 = vmatpush.msra.mxu0 %v521
    %665 = vmatpush.msra.mxu0 %v519
    %666 = vmatpush.msra.mxu0 %v517
    %667 = vmatpush.msra.mxu0 %v515
    %668 = vmatpush.msra.mxu0 %v513
    %669 = vmatpush.msra.mxu0 %v511
    %670 = vmatpush.msra.mxu0 %v509
    %671 = vmatpush.msra.mxu0 %v507
    %672 = vmatpush.msra.mxu0 %v505
    %673 = vmatpush.msra.mxu0 %v503
    %674 = vmatpush.msra.mxu0 %v501
    %675 = vmatpush.msra.mxu0 %v499
    %676 = vmatpush.msra.mxu0 %v497
    %677 = vmatpush.msra.mxu0 %v495
    %678 = vmatmul.f32.gmra.mxu0 %v400
    %v679 = vpop.f32.mrf.mxu0
    %v680 = vadd.f32 %v615, %v679
    %681 = vmatmul.f32.gmra.mxu0 %v404
    %v682 = vpop.f32.mrf.mxu0
    %v683 = vadd.f32 %v618, %v682
    %684 = vmatmul.f32.gmra.mxu0 %v408
    %v685 = vpop.f32.mrf.mxu0
    %v686 = vadd.f32 %v621, %v685
    %687 = vmatmul.f32.gmra.mxu0 %v412
    %v688 = vpop.f32.mrf.mxu0
    %v689 = vadd.f32 %v624, %v688
    %690 = vmatmul.f32.gmra.mxu0 %v416
    %v691 = vpop.f32.mrf.mxu0
    %v692 = vadd.f32 %v627, %v691
    %693 = vmatmul.f32.gmra.mxu0 %v420
    %v694 = vpop.f32.mrf.mxu0
    %v695 = vadd.f32 %v630, %v694
    %696 = vmatmul.f32.gmra.mxu0 %v424
    %v697 = vpop.f32.mrf.mxu0
    %v698 = vadd.f32 %v633, %v697
    %699 = vmatmul.f32.gmra.mxu0 %v428
    %v700 = vpop.f32.mrf.mxu0
    %v701 = vadd.f32 %v636, %v700
    %702 = vmatmul.f32.gmra.mxu0 %v432
    %v703 = vpop.f32.mrf.mxu0
    %v704 = vadd.f32 %v639, %v703
    %705 = vmatmul.f32.gmra.mxu0 %v436
    %v706 = vpop.f32.mrf.mxu0
    %v707 = vadd.f32 %v642, %v706
    %708 = vmatmul.f32.gmra.mxu0 %v440
    %v709 = vpop.f32.mrf.mxu0
    %v710 = vadd.f32 %v645, %v709
    %711 = vmatmul.f32.gmra.mxu0 %v444
    %v712 = vpop.f32.mrf.mxu0
    %v713 = vadd.f32 %v648, %v712
    %714 = vmatmul.f32.gmra.mxu0 %v448
    %v715 = vpop.f32.mrf.mxu0
    %v716 = vadd.f32 %v651, %v715
    %717 = vmatmul.f32.gmra.mxu0 %v452
    %v718 = vpop.f32.mrf.mxu0
    %v719 = vadd.f32 %v654, %v718
    %720 = vmatmul.f32.gmra.mxu0 %v456
    %v721 = vpop.f32.mrf.mxu0
    %v722 = vadd.f32 %v657, %v721
    %723 = vmatmul.f32.gmra.mxu0 %v460
    %v724 = vpop.f32.mrf.mxu0
    %v725 = vadd.f32 %v660, %v724
    %726 = vdwg.mxu0
    %727 = vmatpush.msra.mxu0 %v557
    %728 = vmatpush.msra.mxu0 %v555
    %729 = vmatpush.msra.mxu0 %v553
    %730 = vmatpush.msra.mxu0 %v551
    %731 = vmatpush.msra.mxu0 %v549
    %732 = vmatpush.msra.mxu0 %v547
    %733 = vmatpush.msra.mxu0 %v545
    %734 = vmatpush.msra.mxu0 %v543
    %735 = vmatpush.msra.mxu0 %v541
    %736 = vmatpush.msra.mxu0 %v539
    %737 = vmatpush.msra.mxu0 %v537
    %738 = vmatpush.msra.mxu0 %v535
    %739 = vmatpush.msra.mxu0 %v533
    %740 = vmatpush.msra.mxu0 %v531
    %741 = vmatpush.msra.mxu0 %v529
    %742 = vmatpush.msra.mxu0 %v527
    %743 = vmatmul.f32.gmra.mxu0 %v401
    %v744 = vpop.f32.mrf.mxu0
    %v745 = vadd.f32 %v680, %v744
    %746 = vmatmul.f32.gmra.mxu0 %v405
    %v747 = vpop.f32.mrf.mxu0
    %v748 = vadd.f32 %v683, %v747
    %749 = vmatmul.f32.gmra.mxu0 %v409
    %v750 = vpop.f32.mrf.mxu0
    %v751 = vadd.f32 %v686, %v750
    %752 = vmatmul.f32.gmra.mxu0 %v413
    %v753 = vpop.f32.mrf.mxu0
    %v754 = vadd.f32 %v689, %v753
    %755 = vmatmul.f32.gmra.mxu0 %v417
    %v756 = vpop.f32.mrf.mxu0
    %v757 = vadd.f32 %v692, %v756
    %758 = vmatmul.f32.gmra.mxu0 %v421
    %v759 = vpop.f32.mrf.mxu0
    %v760 = vadd.f32 %v695, %v759
    %761 = vmatmul.f32.gmra.mxu0 %v425
    %v762 = vpop.f32.mrf.mxu0
    %v763 = vadd.f32 %v698, %v762
    %764 = vmatmul.f32.gmra.mxu0 %v429
    %v765 = vpop.f32.mrf.mxu0
    %v766 = vadd.f32 %v701, %v765
    %767 = vmatmul.f32.gmra.mxu0 %v433
    %v768 = vpop.f32.mrf.mxu0
    %v769 = vadd.f32 %v704, %v768
    %770 = vmatmul.f32.gmra.mxu0 %v437
    %v771 = vpop.f32.mrf.mxu0
    %v772 = vadd.f32 %v707, %v771
    %773 = vmatmul.f32.gmra.mxu0 %v441
    %v774 = vpop.f32.mrf.mxu0
    %v775 = vadd.f32 %v710, %v774
    %776 = vmatmul.f32.gmra.mxu0 %v445
    %v777 = vpop.f32.mrf.mxu0
    %v778 = vadd.f32 %v713, %v777
    %779 = vmatmul.f32.gmra.mxu0 %v449
    %v780 = vpop.f32.mrf.mxu0
    %v781 = vadd.f32 %v716, %v780
    %782 = vmatmul.f32.gmra.mxu0 %v453
    %v783 = vpop.f32.mrf.mxu0
    %v784 = vadd.f32 %v719, %v783
    %785 = vmatmul.f32.gmra.mxu0 %v457
    %v786 = vpop.f32.mrf.mxu0
    %v787 = vadd.f32 %v722, %v786
    %788 = vmatmul.f32.gmra.mxu0 %v461
    %v789 = vpop.f32.mrf.mxu0
    %v790 = vadd.f32 %v725, %v789
    %791 = vdwg.mxu0
    %792 = vmatpush.msra.mxu0 %v589
    %793 = vmatpush.msra.mxu0 %v587
    %794 = vmatpush.msra.mxu0 %v585
    %795 = vmatpush.msra.mxu0 %v583
    %796 = vmatpush.msra.mxu0 %v581
    %797 = vmatpush.msra.mxu0 %v579
    %798 = vmatpush.msra.mxu0 %v577
    %799 = vmatpush.msra.mxu0 %v575
    %800 = vmatpush.msra.mxu0 %v573
    %801 = vmatpush.msra.mxu0 %v571
    %802 = vmatpush.msra.mxu0 %v569
    %803 = vmatpush.msra.mxu0 %v567
    %804 = vmatpush.msra.mxu0 %v565
    %805 = vmatpush.msra.mxu0 %v563
    %806 = vmatpush.msra.mxu0 %v561
    %807 = vmatpush.msra.mxu0 %v559
    %808 = vmatmul.f32.gmra.mxu0 %v402
    %v809 = vpop.f32.mrf.mxu0
    %v810 = vadd.f32 %v745, %v809
    %811 = vmatmul.f32.gmra.mxu0 %v406
    %v812 = vpop.f32.mrf.mxu0
    %v813 = vadd.f32 %v748, %v812
    %814 = vmatmul.f32.gmra.mxu0 %v410
    %v815 = vpop.f32.mrf.mxu0
    %v816 = vadd.f32 %v751, %v815
    %817 = vmatmul.f32.gmra.mxu0 %v414
    %v818 = vpop.f32.mrf.mxu0
    %v819 = vadd.f32 %v754, %v818
    %820 = vmatmul.f32.gmra.mxu0 %v418
    %v821 = vpop.f32.mrf.mxu0
    %v822 = vadd.f32 %v757, %v821
    %823 = vmatmul.f32.gmra.mxu0 %v422
    %v824 = vpop.f32.mrf.mxu0
    %v825 = vadd.f32 %v760, %v824
    %826 = vmatmul.f32.gmra.mxu0 %v426
    %v827 = vpop.f32.mrf.mxu0
    %v828 = vadd.f32 %v763, %v827
    %829 = vmatmul.f32.gmra.mxu0 %v430
    %v830 = vpop.f32.mrf.mxu0
    %v831 = vadd.f32 %v766, %v830
    %832 = vmatmul.f32.gmra.mxu0 %v434
    %v833 = vpop.f32.mrf.mxu0
    %v834 = vadd.f32 %v769, %v833
    %835 = vmatmul.f32.gmra.mxu0 %v438
    %v836 = vpop.f32.mrf.mxu0
    %v837 = vadd.f32 %v772, %v836
    %838 = vmatmul.f32.gmra.mxu0 %v442
    %v839 = vpop.f32.mrf.mxu0
    %v840 = vadd.f32 %v775, %v839
    %841 = vmatmul.f32.gmra.mxu0 %v446
    %v842 = vpop.f32.mrf.mxu0
    %v843 = vadd.f32 %v778, %v842
    %844 = vmatmul.f32.gmra.mxu0 %v450
    %v845 = vpop.f32.mrf.mxu0
    %v846 = vadd.f32 %v781, %v845
    %847 = vmatmul.f32.gmra.mxu0 %v454
    %v848 = vpop.f32.mrf.mxu0
    %v849 = vadd.f32 %v784, %v848
    %850 = vmatmul.f32.gmra.mxu0 %v458
    %v851 = vpop.f32.mrf.mxu0
    %v852 = vadd.f32 %v787, %v851
    %853 = vmatmul.f32.gmra.mxu0 %v462
    %v854 = vpop.f32.mrf.mxu0
    %v855 = vadd.f32 %v790, %v854
    %856 = vdwg.mxu0
    %857 = vmatpush.msra.mxu0 %v494
    %858 = vmatpush.msra.mxu0 %v492
    %859 = vmatpush.msra.mxu0 %v490
    %860 = vmatpush.msra.mxu0 %v488
    %861 = vmatpush.msra.mxu0 %v486
    %862 = vmatpush.msra.mxu0 %v484
    %863 = vmatpush.msra.mxu0 %v482
    %864 = vmatpush.msra.mxu0 %v480
    %865 = vmatpush.msra.mxu0 %v478
    %866 = vmatpush.msra.mxu0 %v476
    %867 = vmatpush.msra.mxu0 %v474
    %868 = vmatpush.msra.mxu0 %v472
    %869 = vmatpush.msra.mxu0 %v470
    %870 = vmatpush.msra.mxu0 %v468
    %871 = vmatpush.msra.mxu0 %v466
    %872 = vmatpush.msra.mxu0 %v464
    %873 = vmatmul.f32.gmra.mxu0 %v399
    %v874 = vpop.f32.mrf.mxu0
    %v875 = vadd.f32 %v594, %v874
    %876 = vmatmul.f32.gmra.mxu0 %v403
    %v877 = vpop.f32.mrf.mxu0
    %v878 = vadd.f32 %v594, %v877
    %879 = vmatmul.f32.gmra.mxu0 %v407
    %v880 = vpop.f32.mrf.mxu0
    %v881 = vadd.f32 %v594, %v880
    %882 = vmatmul.f32.gmra.mxu0 %v411
    %v883 = vpop.f32.mrf.mxu0
    %v884 = vadd.f32 %v594, %v883
    %885 = vmatmul.f32.gmra.mxu0 %v415
    %v886 = vpop.f32.mrf.mxu0
    %v887 = vadd.f32 %v594, %v886
    %888 = vmatmul.f32.gmra.mxu0 %v419
    %v889 = vpop.f32.mrf.mxu0
    %v890 = vadd.f32 %v594, %v889
    %891 = vmatmul.f32.gmra.mxu0 %v423
    %v892 = vpop.f32.mrf.mxu0
    %v893 = vadd.f32 %v594, %v892
    %894 = vmatmul.f32.gmra.mxu0 %v427
    %v895 = vpop.f32.mrf.mxu0
    %v896 = vadd.f32 %v594, %v895
    %897 = vmatmul.f32.gmra.mxu0 %v431
    %v898 = vpop.f32.mrf.mxu0
    %v899 = vadd.f32 %v594, %v898
    %900 = vmatmul.f32.gmra.mxu0 %v435
    %v901 = vpop.f32.mrf.mxu0
    %v902 = vadd.f32 %v594, %v901
    %903 = vmatmul.f32.gmra.mxu0 %v439
    %v904 = vpop.f32.mrf.mxu0
    %v905 = vadd.f32 %v594, %v904
    %906 = vmatmul.f32.gmra.mxu0 %v443
    %v907 = vpop.f32.mrf.mxu0
    %v908 = vadd.f32 %v594, %v907
    %909 = vmatmul.f32.gmra.mxu0 %v447
    %v910 = vpop.f32.mrf.mxu0
    %v911 = vadd.f32 %v594, %v910
    %912 = vmatmul.f32.gmra.mxu0 %v451
    %v913 = vpop.f32.mrf.mxu0
    %v914 = vadd.f32 %v594, %v913
    %915 = vmatmul.f32.gmra.mxu0 %v455
    %v916 = vpop.f32.mrf.mxu0
    %v917 = vadd.f32 %v594, %v916
    %918 = vmatmul.f32.gmra.mxu0 %v459
    %v919 = vpop.f32.mrf.mxu0
    %v920 = vadd.f32 %v594, %v919
    %921 = vdwg.mxu0
    %922 = vmatpush.msra.mxu0 %v526
    %923 = vmatpush.msra.mxu0 %v524
    %924 = vmatpush.msra.mxu0 %v522
    %925 = vmatpush.msra.mxu0 %v520
    %926 = vmatpush.msra.mxu0 %v518
    %927 = vmatpush.msra.mxu0 %v516
    %928 = vmatpush.msra.mxu0 %v514
    %929 = vmatpush.msra.mxu0 %v512
    %930 = vmatpush.msra.mxu0 %v510
    %931 = vmatpush.msra.mxu0 %v508
    %932 = vmatpush.msra.mxu0 %v506
    %933 = vmatpush.msra.mxu0 %v504
    %934 = vmatpush.msra.mxu0 %v502
    %935 = vmatpush.msra.mxu0 %v500
    %936 = vmatpush.msra.mxu0 %v498
    %937 = vmatpush.msra.mxu0 %v496
    %938 = vmatmul.f32.gmra.mxu0 %v400
    %v939 = vpop.f32.mrf.mxu0
    %v940 = vadd.f32 %v875, %v939
    %941 = vmatmul.f32.gmra.mxu0 %v404
    %v942 = vpop.f32.mrf.mxu0
    %v943 = vadd.f32 %v878, %v942
    %944 = vmatmul.f32.gmra.mxu0 %v408
    %v945 = vpop.f32.mrf.mxu0
    %v946 = vadd.f32 %v881, %v945
    %947 = vmatmul.f32.gmra.mxu0 %v412
    %v948 = vpop.f32.mrf.mxu0
    %v949 = vadd.f32 %v884, %v948
    %950 = vmatmul.f32.gmra.mxu0 %v416
    %v951 = vpop.f32.mrf.mxu0
    %v952 = vadd.f32 %v887, %v951
    %953 = vmatmul.f32.gmra.mxu0 %v420
    %v954 = vpop.f32.mrf.mxu0
    %v955 = vadd.f32 %v890, %v954
    %956 = vmatmul.f32.gmra.mxu0 %v424
    %v957 = vpop.f32.mrf.mxu0
    %v958 = vadd.f32 %v893, %v957
    %959 = vmatmul.f32.gmra.mxu0 %v428
    %v960 = vpop.f32.mrf.mxu0
    %v961 = vadd.f32 %v896, %v960
    %962 = vmatmul.f32.gmra.mxu0 %v432
    %v963 = vpop.f32.mrf.mxu0
    %v964 = vadd.f32 %v899, %v963
    %965 = vmatmul.f32.gmra.mxu0 %v436
    %v966 = vpop.f32.mrf.mxu0
    %v967 = vadd.f32 %v902, %v966
    %968 = vmatmul.f32.gmra.mxu0 %v440
    %v969 = vpop.f32.mrf.mxu0
    %v970 = vadd.f32 %v905, %v969
    %971 = vmatmul.f32.gmra.mxu0 %v444
    %v972 = vpop.f32.mrf.mxu0
    %v973 = vadd.f32 %v908, %v972
    %974 = vmatmul.f32.gmra.mxu0 %v448
    %v975 = vpop.f32.mrf.mxu0
    %v976 = vadd.f32 %v911, %v975
    %977 = vmatmul.f32.gmra.mxu0 %v452
    %v978 = vpop.f32.mrf.mxu0
    %v979 = vadd.f32 %v914, %v978
    %980 = vmatmul.f32.gmra.mxu0 %v456
    %v981 = vpop.f32.mrf.mxu0
    %v982 = vadd.f32 %v917, %v981
    %983 = vmatmul.f32.gmra.mxu0 %v460
    %v984 = vpop.f32.mrf.mxu0
    %v985 = vadd.f32 %v920, %v984
    %986 = vdwg.mxu0
    %987 = vmatpush.msra.mxu0 %v558
    %988 = vmatpush.msra.mxu0 %v556
    %989 = vmatpush.msra.mxu0 %v554
    %990 = vmatpush.msra.mxu0 %v552
    %991 = vmatpush.msra.mxu0 %v550
    %992 = vmatpush.msra.mxu0 %v548
    %993 = vmatpush.msra.mxu0 %v546
    %994 = vmatpush.msra.mxu0 %v544
    %995 = vmatpush.msra.mxu0 %v542
    %996 = vmatpush.msra.mxu0 %v540
    %997 = vmatpush.msra.mxu0 %v538
    %998 = vmatpush.msra.mxu0 %v536
    %999 = vmatpush.msra.mxu0 %v534
    %1000 = vmatpush.msra.mxu0 %v532
    %1001 = vmatpush.msra.mxu0 %v530
    %1002 = vmatpush.msra.mxu0 %v528
    %1003 = vmatmul.f32.gmra.mxu0 %v401
    %v1004 = vpop.f32.mrf.mxu0
    %v1005 = vadd.f32 %v940, %v1004
    %1006 = vmatmul.f32.gmra.mxu0 %v405
    %v1007 = vpop.f32.mrf.mxu0
    %v1008 = vadd.f32 %v943, %v1007
    %1009 = vmatmul.f32.gmra.mxu0 %v409
    %v1010 = vpop.f32.mrf.mxu0
    %v1011 = vadd.f32 %v946, %v1010
    %1012 = vmatmul.f32.gmra.mxu0 %v413
    %v1013 = vpop.f32.mrf.mxu0
    %v1014 = vadd.f32 %v949, %v1013
    %1015 = vmatmul.f32.gmra.mxu0 %v417
    %v1016 = vpop.f32.mrf.mxu0
    %v1017 = vadd.f32 %v952, %v1016
    %1018 = vmatmul.f32.gmra.mxu0 %v421
    %v1019 = vpop.f32.mrf.mxu0
    %v1020 = vadd.f32 %v955, %v1019
    %1021 = vmatmul.f32.gmra.mxu0 %v425
    %v1022 = vpop.f32.mrf.mxu0
    %v1023 = vadd.f32 %v958, %v1022
    %1024 = vmatmul.f32.gmra.mxu0 %v429
    %v1025 = vpop.f32.mrf.mxu0
    %v1026 = vadd.f32 %v961, %v1025
    %1027 = vmatmul.f32.gmra.mxu0 %v433
    %v1028 = vpop.f32.mrf.mxu0
    %v1029 = vadd.f32 %v964, %v1028
    %1030 = vmatmul.f32.gmra.mxu0 %v437
    %v1031 = vpop.f32.mrf.mxu0
    %v1032 = vadd.f32 %v967, %v1031
    %1033 = vmatmul.f32.gmra.mxu0 %v441
    %v1034 = vpop.f32.mrf.mxu0
    %v1035 = vadd.f32 %v970, %v1034
    %1036 = vmatmul.f32.gmra.mxu0 %v445
    %v1037 = vpop.f32.mrf.mxu0
    %v1038 = vadd.f32 %v973, %v1037
    %1039 = vmatmul.f32.gmra.mxu0 %v449
    %v1040 = vpop.f32.mrf.mxu0
    %v1041 = vadd.f32 %v976, %v1040
    %1042 = vmatmul.f32.gmra.mxu0 %v453
    %v1043 = vpop.f32.mrf.mxu0
    %v1044 = vadd.f32 %v979, %v1043
    %1045 = vmatmul.f32.gmra.mxu0 %v457
    %v1046 = vpop.f32.mrf.mxu0
    %v1047 = vadd.f32 %v982, %v1046
    %1048 = vmatmul.f32.gmra.mxu0 %v461
    %v1049 = vpop.f32.mrf.mxu0
    %v1050 = vadd.f32 %v985, %v1049
    %1051 = vdwg.mxu0
    %1052 = vmatpush.msra.mxu0 %v590
    %1053 = vmatpush.msra.mxu0 %v588
    %1054 = vmatpush.msra.mxu0 %v586
    %1055 = vmatpush.msra.mxu0 %v584
    %1056 = vmatpush.msra.mxu0 %v582
    %1057 = vmatpush.msra.mxu0 %v580
    %1058 = vmatpush.msra.mxu0 %v578
    %1059 = vmatpush.msra.mxu0 %v576
    %1060 = vmatpush.msra.mxu0 %v574
    %1061 = vmatpush.msra.mxu0 %v572
    %1062 = vmatpush.msra.mxu0 %v570
    %1063 = vmatpush.msra.mxu0 %v568
    %1064 = vmatpush.msra.mxu0 %v566
    %1065 = vmatpush.msra.mxu0 %v564
    %1066 = vmatpush.msra.mxu0 %v562
    %1067 = vmatpush.msra.mxu0 %v560
    %1068 = vmatmul.f32.gmra.mxu0 %v402
    %v1069 = vpop.f32.mrf.mxu0
    %v1070 = vadd.f32 %v1005, %v1069
    %1071 = vmatmul.f32.gmra.mxu0 %v406
    %v1072 = vpop.f32.mrf.mxu0
    %v1073 = vadd.f32 %v1008, %v1072
    %1074 = vmatmul.f32.gmra.mxu0 %v410
    %v1075 = vpop.f32.mrf.mxu0
    %v1076 = vadd.f32 %v1011, %v1075
    %1077 = vmatmul.f32.gmra.mxu0 %v414
    %v1078 = vpop.f32.mrf.mxu0
    %v1079 = vadd.f32 %v1014, %v1078
    %1080 = vmatmul.f32.gmra.mxu0 %v418
    %v1081 = vpop.f32.mrf.mxu0
    %v1082 = vadd.f32 %v1017, %v1081
    %1083 = vmatmul.f32.gmra.mxu0 %v422
    %v1084 = vpop.f32.mrf.mxu0
    %v1085 = vadd.f32 %v1020, %v1084
    %1086 = vmatmul.f32.gmra.mxu0 %v426
    %v1087 = vpop.f32.mrf.mxu0
    %v1088 = vadd.f32 %v1023, %v1087
    %1089 = vmatmul.f32.gmra.mxu0 %v430
    %v1090 = vpop.f32.mrf.mxu0
    %v1091 = vadd.f32 %v1026, %v1090
    %1092 = vmatmul.f32.gmra.mxu0 %v434
    %v1093 = vpop.f32.mrf.mxu0
    %v1094 = vadd.f32 %v1029, %v1093
    %1095 = vmatmul.f32.gmra.mxu0 %v438
    %v1096 = vpop.f32.mrf.mxu0
    %v1097 = vadd.f32 %v1032, %v1096
    %1098 = vmatmul.f32.gmra.mxu0 %v442
    %v1099 = vpop.f32.mrf.mxu0
    %v1100 = vadd.f32 %v1035, %v1099
    %1101 = vmatmul.f32.gmra.mxu0 %v446
    %v1102 = vpop.f32.mrf.mxu0
    %v1103 = vadd.f32 %v1038, %v1102
    %1104 = vmatmul.f32.gmra.mxu0 %v450
    %v1105 = vpop.f32.mrf.mxu0
    %v1106 = vadd.f32 %v1041, %v1105
    %1107 = vmatmul.f32.gmra.mxu0 %v454
    %v1108 = vpop.f32.mrf.mxu0
    %v1109 = vadd.f32 %v1044, %v1108
    %1110 = vmatmul.f32.gmra.mxu0 %v458
    %v1111 = vpop.f32.mrf.mxu0
    %v1112 = vadd.f32 %v1047, %v1111
    %1113 = vmatmul.f32.gmra.mxu0 %v462
    %v1114 = vpop.f32.mrf.mxu0
    %v1115 = vadd.f32 %v1050, %v1114
    %1116 = vdwg.mxu0
    %v1117 = vmax.f32 %v810, 0.0
    %v1118 = vmax.f32 %v1070, 0.0
    %v1119 = vmax.f32 %v813, 0.0
    %v1120 = vmax.f32 %v1073, 0.0
    %v1121 = vmax.f32 %v816, 0.0
    %v1122 = vmax.f32 %v1076, 0.0
    %v1123 = vmax.f32 %v819, 0.0
    %v1124 = vmax.f32 %v1079, 0.0
    %v1125 = vmax.f32 %v822, 0.0
    %v1126 = vmax.f32 %v1082, 0.0
    %v1127 = vmax.f32 %v825, 0.0
    %v1128 = vmax.f32 %v1085, 0.0
    %v1129 = vmax.f32 %v828, 0.0
    %v1130 = vmax.f32 %v1088, 0.0
    %v1131 = vmax.f32 %v831, 0.0
    %v1132 = vmax.f32 %v1091, 0.0
    %v1133 = vmax.f32 %v834, 0.0
    %v1134 = vmax.f32 %v1094, 0.0
    %v1135 = vmax.f32 %v837, 0.0
    %v1136 = vmax.f32 %v1097, 0.0
    %v1137 = vmax.f32 %v840, 0.0
    %v1138 = vmax.f32 %v1100, 0.0
    %v1139 = vmax.f32 %v843, 0.0
    %v1140 = vmax.f32 %v1103, 0.0
    %v1141 = vmax.f32 %v846, 0.0
    %v1142 = vmax.f32 %v1106, 0.0
    %v1143 = vmax.f32 %v849, 0.0
    %v1144 = vmax.f32 %v1109, 0.0
    %v1145 = vmax.f32 %v852, 0.0
    %v1146 = vmax.f32 %v1112, 0.0
    %v1147 = vmax.f32 %v855, 0.0
    %v1148 = vmax.f32 %v1115, 0.0
    %v1149 = vld [vmem:[%s5] sm:$0xff]
    %v1150 = vld [vmem:[%s5 + $0x8] sm:$0xff]
    %v1151 = vld [vmem:[%s5 + $0x10] sm:$0xff]
    %v1152 = vld [vmem:[%s5 + $0x18] sm:$0xff]
    %v1153 = vld [vmem:[%s5 + $0x20] sm:$0xff]
    %v1154 = vld [vmem:[%s5 + $0x28] sm:$0xff]
    %v1155 = vld [vmem:[%s5 + $0x30] sm:$0xff]
    %v1156 = vld [vmem:[%s5 + $0x38] sm:$0xff]
    %v1157 = vld [vmem:[%s5 + $0x40] sm:$0xff]
    %v1158 = vld [vmem:[%s5 + $0x48] sm:$0xff]
    %v1159 = vld [vmem:[%s5 + $0x50] sm:$0xff]
    %v1160 = vld [vmem:[%s5 + $0x58] sm:$0xff]
    %v1161 = vld [vmem:[%s5 + $0x60] sm:$0xff]
    %v1162 = vld [vmem:[%s5 + $0x68] sm:$0xff]
    %v1163 = vld [vmem:[%s5 + $0x70] sm:$0xff]
    %v1164 = vld [vmem:[%s5 + $0x78] sm:$0xff]
    %v1165 = vld [vmem:[%s5 + $0x80] sm:$0xff]
    %v1166 = vld [vmem:[%s5 + $0x88] sm:$0xff]
    %v1167 = vld [vmem:[%s5 + $0x90] sm:$0xff]
    %v1168 = vld [vmem:[%s5 + $0x98] sm:$0xff]
    %v1169 = vld [vmem:[%s5 + $0xa0] sm:$0xff]
    %v1170 = vld [vmem:[%s5 + $0xa8] sm:$0xff]
    %v1171 = vld [vmem:[%s5 + $0xb0] sm:$0xff]
    %v1172 = vld [vmem:[%s5 + $0xb8] sm:$0xff]
    %v1173 = vld [vmem:[%s5 + $0xc0] sm:$0xff]
    %v1174 = vld [vmem:[%s5 + $0xc8] sm:$0xff]
    %v1175 = vld [vmem:[%s5 + $0xd0] sm:$0xff]
    %v1176 = vld [vmem:[%s5 + $0xd8] sm:$0xff]
    %v1177 = vld [vmem:[%s5 + $0xe0] sm:$0xff]
    %v1178 = vld [vmem:[%s5 + $0xe8] sm:$0xff]
    %v1179 = vld [vmem:[%s5 + $0xf0] sm:$0xff]
    %v1180 = vld [vmem:[%s5 + $0xf8] sm:$0xff]
    %v1181 = vld [vmem:[%s6] sm:$0x1]
    %v1183 = vperm.slane %v1181, 0
    %1185 = vmatpush.msra.mxu0 %v1164
    %1186 = vmatpush.msra.mxu0 %v1163
    %1187 = vmatpush.msra.mxu0 %v1162
    %1188 = vmatpush.msra.mxu0 %v1161
    %1189 = vmatpush.msra.mxu0 %v1160
    %1190 = vmatpush.msra.mxu0 %v1159
    %1191 = vmatpush.msra.mxu0 %v1158
    %1192 = vmatpush.msra.mxu0 %v1157
    %1193 = vmatpush.msra.mxu0 %v1156
    %1194 = vmatpush.msra.mxu0 %v1155
    %1195 = vmatpush.msra.mxu0 %v1154
    %1196 = vmatpush.msra.mxu0 %v1153
    %1197 = vmatpush.msra.mxu0 %v1152
    %1198 = vmatpush.msra.mxu0 %v1151
    %1199 = vmatpush.msra.mxu0 %v1150
    %1200 = vmatpush.msra.mxu0 %v1149
    %1201 = vmatmul.f32.gmra.mxu0 %v1117
    %v1202 = vpop.f32.mrf.mxu0
    %v1203 = vadd.f32 %v1183, %v1202
    %1204 = vmatmul.f32.gmra.mxu0 %v1119
    %v1205 = vpop.f32.mrf.mxu0
    %v1206 = vadd.f32 %v1183, %v1205
    %1207 = vmatmul.f32.gmra.mxu0 %v1121
    %v1208 = vpop.f32.mrf.mxu0
    %v1209 = vadd.f32 %v1183, %v1208
    %1210 = vmatmul.f32.gmra.mxu0 %v1123
    %v1211 = vpop.f32.mrf.mxu0
    %v1212 = vadd.f32 %v1183, %v1211
    %1213 = vmatmul.f32.gmra.mxu0 %v1125
    %v1214 = vpop.f32.mrf.mxu0
    %v1215 = vadd.f32 %v1183, %v1214
    %1216 = vmatmul.f32.gmra.mxu0 %v1127
    %v1217 = vpop.f32.mrf.mxu0
    %v1218 = vadd.f32 %v1183, %v1217
    %1219 = vmatmul.f32.gmra.mxu0 %v1129
    %v1220 = vpop.f32.mrf.mxu0
    %v1221 = vadd.f32 %v1183, %v1220
    %1222 = vmatmul.f32.gmra.mxu0 %v1131
    %v1223 = vpop.f32.mrf.mxu0
    %v1224 = vadd.f32 %v1183, %v1223
    %1225 = vmatmul.f32.gmra.mxu0 %v1133
    %v1226 = vpop.f32.mrf.mxu0
    %v1227 = vadd.f32 %v1183, %v1226
    %1228 = vmatmul.f32.gmra.mxu0 %v1135
    %v1229 = vpop.f32.mrf.mxu0
    %v1230 = vadd.f32 %v1183, %v1229
    %1231 = vmatmul.f32.gmra.mxu0 %v1137
    %v1232 = vpop.f32.mrf.mxu0
    %v1233 = vadd.f32 %v1183, %v1232
    %1234 = vmatmul.f32.gmra.mxu0 %v1139
    %v1235 = vpop.f32.mrf.mxu0
    %v1236 = vadd.f32 %v1183, %v1235
    %1237 = vmatmul.f32.gmra.mxu0 %v1141
    %v1238 = vpop.f32.mrf.mxu0
    %v1239 = vadd.f32 %v1183, %v1238
    %1240 = vmatmul.f32.gmra.mxu0 %v1143
    %v1241 = vpop.f32.mrf.mxu0
    %v1242 = vadd.f32 %v1183, %v1241
    %1243 = vmatmul.f32.gmra.mxu0 %v1145
    %v1244 = vpop.f32.mrf.mxu0
    %v1245 = vadd.f32 %v1183, %v1244
    %1246 = vmatmul.f32.gmra.mxu0 %v1147
    %v1247 = vpop.f32.mrf.mxu0
    %v1248 = vadd.f32 %v1183, %v1247
    %1249 = vdwg.mxu0
    %1250 = vmatpush.msra.mxu0 %v1180
    %1251 = vmatpush.msra.mxu0 %v1179
    %1252 = vmatpush.msra.mxu0 %v1178
    %1253 = vmatpush.msra.mxu0 %v1177
    %1254 = vmatpush.msra.mxu0 %v1176
    %1255 = vmatpush.msra.mxu0 %v1175
    %1256 = vmatpush.msra.mxu0 %v1174
    %1257 = vmatpush.msra.mxu0 %v1173
    %1258 = vmatpush.msra.mxu0 %v1172
    %1259 = vmatpush.msra.mxu0 %v1171
    %1260 = vmatpush.msra.mxu0 %v1170
    %1261 = vmatpush.msra.mxu0 %v1169
    %1262 = vmatpush.msra.mxu0 %v1168
    %1263 = vmatpush.msra.mxu0 %v1167
    %1264 = vmatpush.msra.mxu0 %v1166
    %1265 = vmatpush.msra.mxu0 %v1165
    %1266 = vmatmul.f32.gmra.mxu0 %v1118
    %v1267 = vpop.f32.mrf.mxu0
    %v1268 = vadd.f32 %v1203, %v1267
    %1269 = vmatmul.f32.gmra.mxu0 %v1120
    %v1270 = vpop.f32.mrf.mxu0
    %v1271 = vadd.f32 %v1206, %v1270
    %1272 = vmatmul.f32.gmra.mxu0 %v1122
    %v1273 = vpop.f32.mrf.mxu0
    %v1274 = vadd.f32 %v1209, %v1273
    %1275 = vmatmul.f32.gmra.mxu0 %v1124
    %v1276 = vpop.f32.mrf.mxu0
    %v1277 = vadd.f32 %v1212, %v1276
    %1278 = vmatmul.f32.gmra.mxu0 %v1126
    %v1279 = vpop.f32.mrf.mxu0
    %v1280 = vadd.f32 %v1215, %v1279
    %1281 = vmatmul.f32.gmra.mxu0 %v1128
    %v1282 = vpop.f32.mrf.mxu0
    %v1283 = vadd.f32 %v1218, %v1282
    %1284 = vmatmul.f32.gmra.mxu0 %v1130
    %v1285 = vpop.f32.mrf.mxu0
    %v1286 = vadd.f32 %v1221, %v1285
    %1287 = vmatmul.f32.gmra.mxu0 %v1132
    %v1288 = vpop.f32.mrf.mxu0
    %v1289 = vadd.f32 %v1224, %v1288
    %1290 = vmatmul.f32.gmra.mxu0 %v1134
    %v1291 = vpop.f32.mrf.mxu0
    %v1292 = vadd.f32 %v1227, %v1291
    %1293 = vmatmul.f32.gmra.mxu0 %v1136
    %v1294 = vpop.f32.mrf.mxu0
    %v1295 = vadd.f32 %v1230, %v1294
    %1296 = vmatmul.f32.gmra.mxu0 %v1138
    %v1297 = vpop.f32.mrf.mxu0
    %v1298 = vadd.f32 %v1233, %v1297
    %1299 = vmatmul.f32.gmra.mxu0 %v1140
    %v1300 = vpop.f32.mrf.mxu0
    %v1301 = vadd.f32 %v1236, %v1300
    %1302 = vmatmul.f32.gmra.mxu0 %v1142
    %v1303 = vpop.f32.mrf.mxu0
    %v1304 = vadd.f32 %v1239, %v1303
    %1305 = vmatmul.f32.gmra.mxu0 %v1144
    %v1306 = vpop.f32.mrf.mxu0
    %v1307 = vadd.f32 %v1242, %v1306
    %1308 = vmatmul.f32.gmra.mxu0 %v1146
    %v1309 = vpop.f32.mrf.mxu0
    %v1310 = vadd.f32 %v1245, %v1309
    %1311 = vmatmul.f32.gmra.mxu0 %v1148
    %v1312 = vpop.f32.mrf.mxu0
    %v1313 = vadd.f32 %v1248, %v1312
    %1314 = vdwg.mxu0
    %v1315 = vmax.f32 %v1268, 0.0
    %v1316 = vmax.f32 %v1271, 0.0
    %v1317 = vmax.f32 %v1274, 0.0
    %v1318 = vmax.f32 %v1277, 0.0
    %v1319 = vmax.f32 %v1280, 0.0
    %v1320 = vmax.f32 %v1283, 0.0
    %v1321 = vmax.f32 %v1286, 0.0
    %v1322 = vmax.f32 %v1289, 0.0
    %v1323 = vmax.f32 %v1292, 0.0
    %v1324 = vmax.f32 %v1295, 0.0
    %v1325 = vmax.f32 %v1298, 0.0
    %v1326 = vmax.f32 %v1301, 0.0
    %v1327 = vmax.f32 %v1304, 0.0
    %v1328 = vmax.f32 %v1307, 0.0
    %v1329 = vmax.f32 %v1310, 0.0
    %v1330 = vmax.f32 %v1313, 0.0
    %v1331 = vld [vmem:[%s7] sm:$0x1]
    %v1333 = vperm.slane %v1331, 0
    %v1335 = vmul.f32 %v1315, %v1333
    %v1336 = vmul.f32 %v1316, %v1333
    %v1337 = vmul.f32 %v1317, %v1333
    %v1338 = vmul.f32 %v1318, %v1333
    %v1339 = vmul.f32 %v1319, %v1333
    %v1340 = vmul.f32 %v1320, %v1333
    %v1341 = vmul.f32 %v1321, %v1333
    %v1342 = vmul.f32 %v1322, %v1333
    %v1343 = vmul.f32 %v1323, %v1333
    %v1344 = vmul.f32 %v1324, %v1333
    %v1345 = vmul.f32 %v1325, %v1333
    %v1346 = vmul.f32 %v1326, %v1333
    %v1347 = vmul.f32 %v1327, %v1333
    %v1348 = vmul.f32 %v1328, %v1333
    %v1349 = vmul.f32 %v1329, %v1333
    %v1350 = vmul.f32 %v1330, %v1333
    %1351 = vadd.xlane.f32.xlu0 %v1335
    %v1352 = vpop.xlane.xlu0 %1351
    %1353 = vadd.xlane.f32.xlu0 %v1336
    %v1354 = vpop.xlane.xlu0 %1353
    %1355 = vadd.xlane.f32.xlu0 %v1337
    %v1356 = vpop.xlane.xlu0 %1355
    %1357 = vadd.xlane.f32.xlu0 %v1338
    %v1358 = vpop.xlane.xlu0 %1357
    %1359 = vadd.xlane.f32.xlu0 %v1339
    %v1360 = vpop.xlane.xlu0 %1359
    %1361 = vadd.xlane.f32.xlu0 %v1340
    %v1362 = vpop.xlane.xlu0 %1361
    %1363 = vadd.xlane.f32.xlu0 %v1341
    %v1364 = vpop.xlane.xlu0 %1363
    %1365 = vadd.xlane.f32.xlu0 %v1342
    %v1366 = vpop.xlane.xlu0 %1365
    %1367 = vadd.xlane.f32.xlu0 %v1343
    %v1368 = vpop.xlane.xlu0 %1367
    %1369 = vadd.xlane.f32.xlu0 %v1344
    %v1370 = vpop.xlane.xlu0 %1369
    %1371 = vadd.xlane.f32.xlu0 %v1345
    %v1372 = vpop.xlane.xlu0 %1371
    %1373 = vadd.xlane.f32.xlu0 %v1346
    %v1374 = vpop.xlane.xlu0 %1373
    %1375 = vadd.xlane.f32.xlu0 %v1347
    %v1376 = vpop.xlane.xlu0 %1375
    %1377 = vadd.xlane.f32.xlu0 %v1348
    %v1378 = vpop.xlane.xlu0 %1377
    %1379 = vadd.xlane.f32.xlu0 %v1349
    %v1380 = vpop.xlane.xlu0 %1379
    %1381 = vadd.xlane.f32.xlu0 %v1350
    %v1382 = vpop.xlane.xlu0 %1381
    %s1383 = sld [smem:[#allocation2]]
    %v1384 = vstv %s1383
    %v1385 = vadd.f32 %v1352, %v1384
    %v1386 = vadd.f32 %v1354, %v1384
    %v1387 = vadd.f32 %v1356, %v1384
    %v1388 = vadd.f32 %v1358, %v1384
    %v1389 = vadd.f32 %v1360, %v1384
    %v1390 = vadd.f32 %v1362, %v1384
    %v1391 = vadd.f32 %v1364, %v1384
    %v1392 = vadd.f32 %v1366, %v1384
    %v1393 = vadd.f32 %v1368, %v1384
    %v1394 = vadd.f32 %v1370, %v1384
    %v1395 = vadd.f32 %v1372, %v1384
    %v1396 = vadd.f32 %v1374, %v1384
    %v1397 = vadd.f32 %v1376, %v1384
    %v1398 = vadd.f32 %v1378, %v1384
    %v1399 = vadd.f32 %v1380, %v1384
    %v1400 = vadd.f32 %v1382, %v1384
    %v1417 = vlaneseq
    %v1418 = vand.u32 %v1417, 127
    %v1419 = vperm.slane %v1385, %v1418
    %v1420 = vadd.s32 %v1418, 4294967288
    %v1421 = vperm.slane %v1386, %v1420
    %vm1422 = vcmask 130112
    %v1423 = vsel %vm1422, %v1421, %v1419
    %v1424 = vadd.s32 %v1418, 4294967280
    %v1425 = vperm.slane %v1387, %v1424
    %vm1426 = vcmask 195712
    %v1427 = vsel %vm1426, %v1425, %v1423
    %v1428 = vadd.s32 %v1418, 4294967272
    %v1429 = vperm.slane %v1388, %v1428
    %vm1430 = vcmask 261312
    %v1431 = vsel %vm1430, %v1429, %v1427
    %v1432 = vadd.s32 %v1418, 4294967264
    %v1433 = vperm.slane %v1389, %v1432
    %vm1434 = vcmask 326912
    %v1435 = vsel %vm1434, %v1433, %v1431
    %v1436 = vadd.s32 %v1418, 4294967256
    %v1437 = vperm.slane %v1390, %v1436
    %vm1438 = vcmask 392512
    %v1439 = vsel %vm1438, %v1437, %v1435
    %v1440 = vadd.s32 %v1418, 4294967248
    %v1441 = vperm.slane %v1391, %v1440
    %vm1442 = vcmask 458112
    %v1443 = vsel %vm1442, %v1441, %v1439
    %v1444 = vadd.s32 %v1418, 4294967240
    %v1445 = vperm.slane %v1392, %v1444
    %vm1446 = vcmask 523712
    %v1447 = vsel %vm1446, %v1445, %v1443
    %v1448 = vadd.s32 %v1418, 4294967232
    %v1449 = vperm.slane %v1393, %v1448
    %vm1450 = vcmask 589312
    %v1451 = vsel %vm1450, %v1449, %v1447
    %v1452 = vadd.s32 %v1418, 4294967224
    %v1453 = vperm.slane %v1394, %v1452
    %vm1454 = vcmask 654912
    %v1455 = vsel %vm1454, %v1453, %v1451
    %v1456 = vadd.s32 %v1418, 4294967216
    %v1457 = vperm.slane %v1395, %v1456
    %vm1458 = vcmask 720512
    %v1459 = vsel %vm1458, %v1457, %v1455
    %v1460 = vadd.s32 %v1418, 4294967208
    %v1461 = vperm.slane %v1396, %v1460
    %vm1462 = vcmask 786112
    %v1463 = vsel %vm1462, %v1461, %v1459
    %v1464 = vadd.s32 %v1418, 4294967200
    %v1465 = vperm.slane %v1397, %v1464
    %vm1466 = vcmask 851712
    %v1467 = vsel %vm1466, %v1465, %v1463
    %v1468 = vadd.s32 %v1418, 4294967192
    %v1469 = vperm.slane %v1398, %v1468
    %vm1470 = vcmask 917312
    %v1471 = vsel %vm1470, %v1469, %v1467
    %v1472 = vadd.s32 %v1418, 4294967184
    %v1473 = vperm.slane %v1399, %v1472
    %vm1474 = vcmask 982912
    %v1475 = vsel %vm1474, %v1473, %v1471
    %v1476 = vadd.s32 %v1418, 4294967176
    %v1477 = vperm.slane %v1400, %v1476
    %vm1478 = vcmask 1048512
    %v1479 = vsel %vm1478, %v1477, %v1475
    %1481 = vst [vmem:[%s9] sm:$0x1] %v1479
    // Predicated region
    $region42: #{regression_head_forward.1} parent=1 // pred_check
      _
    $region43: #{regression_head_forward.1} parent=1 // pred_check_branch
      %1483 = sbr.rel (0) target = $region45
    $region44: #{regression_head_forward.1} parent=1 // pred_region
      _
    $region45: #{regression_head_forward.1} parent=1 // pred_fallthru
      _
    // Predicated region
    $region46: #{regression_head_forward.1} parent=1 // pred_check
      _
    $region47: #{regression_head_forward.1} parent=1 // pred_check_branch
      %1485 = sbr.rel (0) target = $region49
    $region48: #{regression_head_forward.1} parent=1 // pred_region
      _
    $region49: #{regression_head_forward.1} parent=1 // pred_fallthru
      _
    %1486 = vsyncpa [#allocation4], 1

</llo_original>
